<compile_context>
chip_gen: v7x
topology: tpu7x:2x2x1
jax: 0.10.0
libtpu: 0.0.40
codegen_flags: <defaults>
</compile_context>

<pallas_src>
import functools

import jax
import jax.numpy as jnp
from jax.experimental import pallas as pl
from jax.experimental.pallas import tpu as pltpu

LATENT_DIM = 2
IN_DIM = 15
HID = 6
HID_PAD = 8          # padded hidden width (one sublane tile)
PAD_F = 16           # padded io feature width

# (out, in) per Linear, encoder then decoder — PyTorch weight layout.
LAYER_DIMS = [
    (HID, IN_DIM), (HID, HID), (HID, HID), (LATENT_DIM, HID),   # encoder
    (HID, LATENT_DIM), (HID, HID), (HID, HID), (IN_DIM, HID),   # decoder
]
N_LAYERS = len(LAYER_DIMS)
_TOTAL_MACS = sum(o * i for (o, i) in LAYER_DIMS)               # 348
_TOTAL_SIN = sum(o for (o, _) in LAYER_DIMS[:-1])               # 38
_TOTAL_SIG = LAYER_DIMS[-1][0]                                  # 15


def _ae_kernel(x_ref, w_ref, b_ref, out_ref):
    """x_ref/out_ref: [TB, 15] (native torch layout); w_ref: [8,16,16]; b_ref: [8,16,1].

    Compute runs batch-on-lanes ([features, TB]) so bias/sin/sigmoid hit dense
    vregs; the layout change is fused into the first MXU contraction and one
    final XLU transpose, so no extra HBM layout passes exist outside the kernel.
    """
    x = x_ref[...]                                               # [TB, 15] f32

    # Layer 0: h[o, b] = sum_i W0[o, i] * x[b, i]  (transposed-RHS contraction,
    # the q@k^T pattern) — the input transpose is absorbed by the MXU.
    w0 = w_ref[0][:HID_PAD, :IN_DIM]                             # [8, 15]
    h = jax.lax.dot_general(
        w0, x, (((1,), (1,)), ((), ())),
        preferred_element_type=jnp.float32)                      # [8, TB]
    h = jnp.sin(h + b_ref[0][:HID_PAD, :])

    # Layers 1..6: 8-row activations (all hidden widths <= 6), batch on lanes.
    for li in range(1, N_LAYERS - 1):
        w = w_ref[li][:HID_PAD, :HID_PAD]                        # [8, 8]
        h = jnp.dot(w, h, preferred_element_type=jnp.float32)    # [8, TB]
        h = jnp.sin(h + b_ref[li][:HID_PAD, :])

    # Layer 7 + Sigmoid, then a single XLU transpose back to [TB, F] layout.
    w7 = w_ref[N_LAYERS - 1][:, :HID_PAD]                        # [16, 8]
    o = jnp.dot(w7, h, preferred_element_type=jnp.float32) + b_ref[N_LAYERS - 1]
    o = jax.nn.sigmoid(o)                                        # [16, TB]
    out_ref[...] = o.T[:, :IN_DIM]                               # [TB, 15]


def _round_up(x: int, m: int) -> int:
    return ((x + m - 1) // m) * m


@functools.partial(jax.jit, static_argnames=("block_batch",))
def autoencoder_forward(x, w_packed, b_packed, *, block_batch=16384):
    """x: [B, 15] float32; w_packed: [8,16,16]; b_packed: [8,16,1]. Returns [B, 15]."""
    batch = x.shape[0]
    x = x.astype(jnp.float32)

    # Batch tile: forced multiple of 128 lanes, large enough to amortize the
    # per-grid-step pipeline overhead, capped so batches > 128 give >= 2 grid
    # steps (v7x megacore sharding of the "parallel" axis).
    bb = max(128, min((block_batch // 128) * 128, 32768))
    b128 = _round_up(batch, 128)
    if b128 >= 256:
        tb = min(bb, _round_up(b128 // 2, 128))
    else:
        tb = b128
    b_pad = _round_up(batch, tb)
    grid = (b_pad // tb,)

    if b_pad != batch:                 # only pads when batch is not a tile multiple
        x = jnp.pad(x, ((0, b_pad - batch), (0, 0)))

    out = pl.pallas_call(
        _ae_kernel,
        out_shape=jax.ShapeDtypeStruct((b_pad, IN_DIM), jnp.float32),
        grid=grid,
        in_specs=[
            pl.BlockSpec((tb, IN_DIM), lambda i: (i, 0)),                  # activations
            pl.BlockSpec((N_LAYERS, PAD_F, PAD_F), lambda i: (0, 0, 0)),   # weights (resident)
            pl.BlockSpec((N_LAYERS, PAD_F, 1), lambda i: (0, 0, 0)),       # biases  (resident)
        ],
        out_specs=pl.BlockSpec((tb, IN_DIM), lambda i: (i, 0)),
        compiler_params=pltpu.CompilerParams(
            dimension_semantics=("parallel",),     # megacore shard on v7x
            vmem_limit_bytes=32 * 1024 * 1024,
        ),
        cost_estimate=pl.CostEstimate(
            flops=2 * b_pad * _TOTAL_MACS,
            transcendentals=b_pad * (_TOTAL_SIN + _TOTAL_SIG),
            bytes_accessed=2 * b_pad * IN_DIM * 4 + (w_packed.size + b_packed.size) * 4,
        ),
    )(x, w_packed, b_packed)

    return out if b_pad == batch else out[:batch]


def init_params(key):
    """torch.nn.Linear-style init: U(-1/sqrt(in), 1/sqrt(in)); W stored [out, in]."""
    params = []
    for (dout, din) in LAYER_DIMS:
        key, kw, kb = jax.random.split(key, 3)
        bound = 1.0 / jnp.sqrt(jnp.float32(din))
        w = jax.random.uniform(kw, (dout, din), jnp.float32, -bound, bound)
        b = jax.random.uniform(kb, (dout,), jnp.float32, -bound, bound)
        params.append((w, b))
    return params


def pack_params(params):
    """Pack the 8 (W, b) pairs into zero-padded [8,16,16] / [8,16,1] slabs."""
    w_packed = jnp.zeros((N_LAYERS, PAD_F, PAD_F), jnp.float32)
    b_packed = jnp.zeros((N_LAYERS, PAD_F, 1), jnp.float32)
    for li, (w, b) in enumerate(params):
        dout, din = w.shape
        w_packed = w_packed.at[li, :dout, :din].set(w)
        b_packed = b_packed.at[li, :dout, 0].set(b)
    return w_packed, b_packed


def reference_forward(x, params):
    """Plain-JAX reference in the natural [B, F] layout."""
    h = x
    for li, (w, b) in enumerate(params):
        h = jnp.dot(h, w.T, precision=jax.lax.Precision.HIGHEST) + b
        h = jnp.sin(h) if li < N_LAYERS - 1 else jax.nn.sigmoid(h)
    return h


if __name__ == "__main__":
    key = jax.random.PRNGKey(0)
    kx, kp = jax.random.split(key)

    batch = 8
    x = jax.random.normal(kx, (batch, IN_DIM), jnp.float32)
    params = init_params(kp)
    w_packed, b_packed = pack_params(params)

    out = autoencoder_forward(x, w_packed, b_packed)
    out = jax.block_until_ready(out)

    ref = reference_forward(x, params)
    assert out.shape == (batch, IN_DIM), out.shape
    assert jnp.allclose(out, ref, atol=1e-5, rtol=1e-5), float(
        jnp.max(jnp.abs(out - ref))
    )

    print("KERNEL_OK")
</pallas_src>

<mosaic_0001>
module attributes {stable_mosaic.version = 11 : i64} {
  func.func @_ae_kernel(%arg0: i32, %arg1: memref<128x15xf32, #tpu.memory_space<vmem>>, %arg2: memref<8x16x16xf32, #tpu.memory_space<vmem>>, %arg3: memref<8x16x1xf32, #tpu.memory_space<vmem>>, %arg4: memref<128x15xf32, #tpu.memory_space<vmem>>) attributes {dimension_semantics = [#tpu.dimension_semantics<parallel>], iteration_bounds = array<i64: 1>, scalar_prefetch = 0 : i64, scratch_operands = 0 : i64, tpu.core_type = #tpu.core_type<tc>, window_params = [{transform_indices = @transform_0, window_bounds = array<i64: 128, 15>}, {pipeline_mode = #tpu.pipeline_mode<synchronous>, transform_indices = @transform_1, window_bounds = array<i64: 8, 16, 16>}, {pipeline_mode = #tpu.pipeline_mode<synchronous>, transform_indices = @transform_2, window_bounds = array<i64: 8, 16, 1>}, {transform_indices = @transform_3, window_bounds = array<i64: 128, 15>}]} {
    %c0 = arith.constant 0 : index
    %c0_0 = arith.constant 0 : index
    %0 = vector.load %arg1[%c0, %c0_0] : memref<128x15xf32, #tpu.memory_space<vmem>>, vector<128x15xf32>
    %c0_1 = arith.constant 0 : index
    %c0_2 = arith.constant 0 : index
    %c0_3 = arith.constant 0 : index
    %1 = vector.load %arg2[%c0_1, %c0_2, %c0_3] : memref<8x16x16xf32, #tpu.memory_space<vmem>>, vector<1x16x16xf32>
    %2 = vector.shape_cast %1 : vector<1x16x16xf32> to vector<16x16xf32>
    %3 = vector.extract_strided_slice %2 {offsets = [0, 0], sizes = [8, 15], strides = [1, 1]} : vector<16x16xf32> to vector<8x15xf32>
    %cst = arith.constant dense<0.000000e+00> : vector<8x128xf32>
    %4 = tpu.matmul %3, %0, %cst {dimension_numbers = #tpu.dot_dimension_numbers<[1], [1], [0], [0], [0, 0, 1, 0], [], []>} : vector<8x15xf32>, vector<128x15xf32>, vector<8x128xf32> -> vector<8x128xf32>
    %c0_4 = arith.constant 0 : index
    %c0_5 = arith.constant 0 : index
    %c0_6 = arith.constant 0 : index
    %5 = vector.load %arg3[%c0_4, %c0_5, %c0_6] : memref<8x16x1xf32, #tpu.memory_space<vmem>>, vector<1x16x1xf32>
    %6 = vector.shape_cast %5 : vector<1x16x1xf32> to vector<16x1xf32>
    %7 = vector.extract_strided_slice %6 {offsets = [0, 0], sizes = [8, 1], strides = [1, 1]} : vector<16x1xf32> to vector<8x1xf32>
    %8 = vector.broadcast %7 : vector<8x1xf32> to vector<8x128xf32>
    %9 = arith.addf %4, %8 : vector<8x128xf32>
    %10 = math.sin %9 : vector<8x128xf32>
    %c1 = arith.constant 1 : index
    %c0_7 = arith.constant 0 : index
    %c0_8 = arith.constant 0 : index
    %11 = vector.load %arg2[%c1, %c0_7, %c0_8] : memref<8x16x16xf32, #tpu.memory_space<vmem>>, vector<1x16x16xf32>
    %12 = vector.shape_cast %11 : vector<1x16x16xf32> to vector<16x16xf32>
    %13 = vector.extract_strided_slice %12 {offsets = [0, 0], sizes = [8, 8], strides = [1, 1]} : vector<16x16xf32> to vector<8x8xf32>
    %cst_9 = arith.constant dense<0.000000e+00> : vector<8x128xf32>
    %14 = tpu.matmul %13, %10, %cst_9 {dimension_numbers = #tpu.dot_dimension_numbers<[1], [0], [0], [1], [0, 0, 1, 1], [], []>} : vector<8x8xf32>, vector<8x128xf32>, vector<8x128xf32> -> vector<8x128xf32>
    %c1_10 = arith.constant 1 : index
    %c0_11 = arith.constant 0 : index
    %c0_12 = arith.constant 0 : index
    %15 = vector.load %arg3[%c1_10, %c0_11, %c0_12] : memref<8x16x1xf32, #tpu.memory_space<vmem>>, vector<1x16x1xf32>
    %16 = vector.shape_cast %15 : vector<1x16x1xf32> to vector<16x1xf32>
    %17 = vector.extract_strided_slice %16 {offsets = [0, 0], sizes = [8, 1], strides = [1, 1]} : vector<16x1xf32> to vector<8x1xf32>
    %18 = vector.broadcast %17 : vector<8x1xf32> to vector<8x128xf32>
    %19 = arith.addf %14, %18 : vector<8x128xf32>
    %20 = math.sin %19 : vector<8x128xf32>
    %c2 = arith.constant 2 : index
    %c0_13 = arith.constant 0 : index
    %c0_14 = arith.constant 0 : index
    %21 = vector.load %arg2[%c2, %c0_13, %c0_14] : memref<8x16x16xf32, #tpu.memory_space<vmem>>, vector<1x16x16xf32>
    %22 = vector.shape_cast %21 : vector<1x16x16xf32> to vector<16x16xf32>
    %23 = vector.extract_strided_slice %22 {offsets = [0, 0], sizes = [8, 8], strides = [1, 1]} : vector<16x16xf32> to vector<8x8xf32>
    %cst_15 = arith.constant dense<0.000000e+00> : vector<8x128xf32>
    %24 = tpu.matmul %23, %20, %cst_15 {dimension_numbers = #tpu.dot_dimension_numbers<[1], [0], [0], [1], [0, 0, 1, 1], [], []>} : vector<8x8xf32>, vector<8x128xf32>, vector<8x128xf32> -> vector<8x128xf32>
    %c2_16 = arith.constant 2 : index
    %c0_17 = arith.constant 0 : index
    %c0_18 = arith.constant 0 : index
    %25 = vector.load %arg3[%c2_16, %c0_17, %c0_18] : memref<8x16x1xf32, #tpu.memory_space<vmem>>, vector<1x16x1xf32>
    %26 = vector.shape_cast %25 : vector<1x16x1xf32> to vector<16x1xf32>
    %27 = vector.extract_strided_slice %26 {offsets = [0, 0], sizes = [8, 1], strides = [1, 1]} : vector<16x1xf32> to vector<8x1xf32>
    %28 = vector.broadcast %27 : vector<8x1xf32> to vector<8x128xf32>
    %29 = arith.addf %24, %28 : vector<8x128xf32>
    %30 = math.sin %29 : vector<8x128xf32>
    %c3 = arith.constant 3 : index
    %c0_19 = arith.constant 0 : index
    %c0_20 = arith.constant 0 : index
    %31 = vector.load %arg2[%c3, %c0_19, %c0_20] : memref<8x16x16xf32, #tpu.memory_space<vmem>>, vector<1x16x16xf32>
    %32 = vector.shape_cast %31 : vector<1x16x16xf32> to vector<16x16xf32>
    %33 = vector.extract_strided_slice %32 {offsets = [0, 0], sizes = [8, 8], strides = [1, 1]} : vector<16x16xf32> to vector<8x8xf32>
    %cst_21 = arith.constant dense<0.000000e+00> : vector<8x128xf32>
    %34 = tpu.matmul %33, %30, %cst_21 {dimension_numbers = #tpu.dot_dimension_numbers<[1], [0], [0], [1], [0, 0, 1, 1], [], []>} : vector<8x8xf32>, vector<8x128xf32>, vector<8x128xf32> -> vector<8x128xf32>
    %c3_22 = arith.constant 3 : index
    %c0_23 = arith.constant 0 : index
    %c0_24 = arith.constant 0 : index
    %35 = vector.load %arg3[%c3_22, %c0_23, %c0_24] : memref<8x16x1xf32, #tpu.memory_space<vmem>>, vector<1x16x1xf32>
    %36 = vector.shape_cast %35 : vector<1x16x1xf32> to vector<16x1xf32>
    %37 = vector.extract_strided_slice %36 {offsets = [0, 0], sizes = [8, 1], strides = [1, 1]} : vector<16x1xf32> to vector<8x1xf32>
    %38 = vector.broadcast %37 : vector<8x1xf32> to vector<8x128xf32>
    %39 = arith.addf %34, %38 : vector<8x128xf32>
    %40 = math.sin %39 : vector<8x128xf32>
    %c4 = arith.constant 4 : index
    %c0_25 = arith.constant 0 : index
    %c0_26 = arith.constant 0 : index
    %41 = vector.load %arg2[%c4, %c0_25, %c0_26] : memref<8x16x16xf32, #tpu.memory_space<vmem>>, vector<1x16x16xf32>
    %42 = vector.shape_cast %41 : vector<1x16x16xf32> to vector<16x16xf32>
    %43 = vector.extract_strided_slice %42 {offsets = [0, 0], sizes = [8, 8], strides = [1, 1]} : vector<16x16xf32> to vector<8x8xf32>
    %cst_27 = arith.constant dense<0.000000e+00> : vector<8x128xf32>
    %44 = tpu.matmul %43, %40, %cst_27 {dimension_numbers = #tpu.dot_dimension_numbers<[1], [0], [0], [1], [0, 0, 1, 1], [], []>} : vector<8x8xf32>, vector<8x128xf32>, vector<8x128xf32> -> vector<8x128xf32>
    %c4_28 = arith.constant 4 : index
    %c0_29 = arith.constant 0 : index
    %c0_30 = arith.constant 0 : index
    %45 = vector.load %arg3[%c4_28, %c0_29, %c0_30] : memref<8x16x1xf32, #tpu.memory_space<vmem>>, vector<1x16x1xf32>
    %46 = vector.shape_cast %45 : vector<1x16x1xf32> to vector<16x1xf32>
    %47 = vector.extract_strided_slice %46 {offsets = [0, 0], sizes = [8, 1], strides = [1, 1]} : vector<16x1xf32> to vector<8x1xf32>
    %48 = vector.broadcast %47 : vector<8x1xf32> to vector<8x128xf32>
    %49 = arith.addf %44, %48 : vector<8x128xf32>
    %50 = math.sin %49 : vector<8x128xf32>
    %c5 = arith.constant 5 : index
    %c0_31 = arith.constant 0 : index
    %c0_32 = arith.constant 0 : index
    %51 = vector.load %arg2[%c5, %c0_31, %c0_32] : memref<8x16x16xf32, #tpu.memory_space<vmem>>, vector<1x16x16xf32>
    %52 = vector.shape_cast %51 : vector<1x16x16xf32> to vector<16x16xf32>
    %53 = vector.extract_strided_slice %52 {offsets = [0, 0], sizes = [8, 8], strides = [1, 1]} : vector<16x16xf32> to vector<8x8xf32>
    %cst_33 = arith.constant dense<0.000000e+00> : vector<8x128xf32>
    %54 = tpu.matmul %53, %50, %cst_33 {dimension_numbers = #tpu.dot_dimension_numbers<[1], [0], [0], [1], [0, 0, 1, 1], [], []>} : vector<8x8xf32>, vector<8x128xf32>, vector<8x128xf32> -> vector<8x128xf32>
    %c5_34 = arith.constant 5 : index
    %c0_35 = arith.constant 0 : index
    %c0_36 = arith.constant 0 : index
    %55 = vector.load %arg3[%c5_34, %c0_35, %c0_36] : memref<8x16x1xf32, #tpu.memory_space<vmem>>, vector<1x16x1xf32>
    %56 = vector.shape_cast %55 : vector<1x16x1xf32> to vector<16x1xf32>
    %57 = vector.extract_strided_slice %56 {offsets = [0, 0], sizes = [8, 1], strides = [1, 1]} : vector<16x1xf32> to vector<8x1xf32>
    %58 = vector.broadcast %57 : vector<8x1xf32> to vector<8x128xf32>
    %59 = arith.addf %54, %58 : vector<8x128xf32>
    %60 = math.sin %59 : vector<8x128xf32>
    %c6 = arith.constant 6 : index
    %c0_37 = arith.constant 0 : index
    %c0_38 = arith.constant 0 : index
    %61 = vector.load %arg2[%c6, %c0_37, %c0_38] : memref<8x16x16xf32, #tpu.memory_space<vmem>>, vector<1x16x16xf32>
    %62 = vector.shape_cast %61 : vector<1x16x16xf32> to vector<16x16xf32>
    %63 = vector.extract_strided_slice %62 {offsets = [0, 0], sizes = [8, 8], strides = [1, 1]} : vector<16x16xf32> to vector<8x8xf32>
    %cst_39 = arith.constant dense<0.000000e+00> : vector<8x128xf32>
    %64 = tpu.matmul %63, %60, %cst_39 {dimension_numbers = #tpu.dot_dimension_numbers<[1], [0], [0], [1], [0, 0, 1, 1], [], []>} : vector<8x8xf32>, vector<8x128xf32>, vector<8x128xf32> -> vector<8x128xf32>
    %c6_40 = arith.constant 6 : index
    %c0_41 = arith.constant 0 : index
    %c0_42 = arith.constant 0 : index
    %65 = vector.load %arg3[%c6_40, %c0_41, %c0_42] : memref<8x16x1xf32, #tpu.memory_space<vmem>>, vector<1x16x1xf32>
    %66 = vector.shape_cast %65 : vector<1x16x1xf32> to vector<16x1xf32>
    %67 = vector.extract_strided_slice %66 {offsets = [0, 0], sizes = [8, 1], strides = [1, 1]} : vector<16x1xf32> to vector<8x1xf32>
    %68 = vector.broadcast %67 : vector<8x1xf32> to vector<8x128xf32>
    %69 = arith.addf %64, %68 : vector<8x128xf32>
    %70 = math.sin %69 : vector<8x128xf32>
    %c7 = arith.constant 7 : index
    %c0_43 = arith.constant 0 : index
    %c0_44 = arith.constant 0 : index
    %71 = vector.load %arg2[%c7, %c0_43, %c0_44] : memref<8x16x16xf32, #tpu.memory_space<vmem>>, vector<1x16x16xf32>
    %72 = vector.shape_cast %71 : vector<1x16x16xf32> to vector<16x16xf32>
    %73 = vector.extract_strided_slice %72 {offsets = [0, 0], sizes = [16, 8], strides = [1, 1]} : vector<16x16xf32> to vector<16x8xf32>
    %cst_45 = arith.constant dense<0.000000e+00> : vector<16x128xf32>
    %74 = tpu.matmul %73, %70, %cst_45 {dimension_numbers = #tpu.dot_dimension_numbers<[1], [0], [0], [1], [0, 0, 1, 1], [], []>} : vector<16x8xf32>, vector<8x128xf32>, vector<16x128xf32> -> vector<16x128xf32>
    %c7_46 = arith.constant 7 : index
    %c0_47 = arith.constant 0 : index
    %c0_48 = arith.constant 0 : index
    %75 = vector.load %arg3[%c7_46, %c0_47, %c0_48] : memref<8x16x1xf32, #tpu.memory_space<vmem>>, vector<1x16x1xf32>
    %76 = vector.shape_cast %75 : vector<1x16x1xf32> to vector<16x1xf32>
    %77 = vector.broadcast %76 : vector<16x1xf32> to vector<16x128xf32>
    %78 = arith.addf %74, %77 : vector<16x128xf32>
    %79 = arith.negf %78 : vector<16x128xf32>
    %80 = math.exp %79 : vector<16x128xf32>
    %cst_49 = arith.constant 1.000000e+00 : f32
    %81 = vector.broadcast %cst_49 : f32 to vector<16x128xf32>
    %82 = arith.addf %81, %80 : vector<16x128xf32>
    %83 = arith.divf %81, %82 : vector<16x128xf32>
    %84 = tpu.transpose %83, [1, 0] : vector<16x128xf32> -> vector<128x16xf32>
    %85 = vector.extract_strided_slice %84 {offsets = [0, 0], sizes = [128, 15], strides = [1, 1]} : vector<128x16xf32> to vector<128x15xf32>
    %c0_50 = arith.constant 0 : index
    %c0_51 = arith.constant 0 : index
    %86 = vector.load %arg4[%c0_50, %c0_51] : memref<128x15xf32, #tpu.memory_space<vmem>>, vector<128x15xf32>
    tpu.vector_store %arg4[%c0_50, %c0_51], %85 {strides = array<i32>} : memref<128x15xf32, #tpu.memory_space<vmem>>, vector<128x15xf32>,
    return
  }
  func.func @transform_0(%arg0: i32) -> (i32, i32) {
    %c0_i32 = arith.constant 0 : i32
    %c0_i32_0 = arith.constant 0 : i32
    return %arg0, %c0_i32 : i32, i32
  }
  func.func @transform_1(%arg0: i32) -> (i32, i32, i32) {
    %c0_i32 = arith.constant 0 : i32
    %c0_i32_0 = arith.constant 0 : i32
    %c0_i32_1 = arith.constant 0 : i32
    %c0_i32_2 = arith.constant 0 : i32
    return %c0_i32, %c0_i32_0, %c0_i32_1 : i32, i32, i32
  }
  func.func @transform_2(%arg0: i32) -> (i32, i32, i32) {
    %c0_i32 = arith.constant 0 : i32
    %c0_i32_0 = arith.constant 0 : i32
    %c0_i32_1 = arith.constant 0 : i32
    %c0_i32_2 = arith.constant 0 : i32
    return %c0_i32, %c0_i32_0, %c0_i32_1 : i32, i32, i32
  }
  func.func @transform_3(%arg0: i32) -> (i32, i32) {
    %c0_i32 = arith.constant 0 : i32
    %c0_i32_0 = arith.constant 0 : i32
    return %arg0, %c0_i32 : i32, i32
  }
}

</mosaic_0001>

<llo_original>
// kernel: autoencoder_forward.1
$region0: #{autoencoder_forward.1}
  #allocation0 [shape = 'u32[]', space=smem, size = 0x4, offset = 0x4, fixed_abs, tag = 'smem constant byte address 0x4 - core index']
  #allocation1 [shape = 'u32[144,128]{1,0:T(1,128)}', space=vmem, size = 0x12000, scoped, tag = 'internal scratch']
  %s0 = inlined_call_operand.vmem [shape: f32[128,15], index: 0, kind: input, shape index: {}]
  %s1 = inlined_call_operand.vmem [shape: f32[8,16,16], index: 1, kind: input, shape index: {}]
  %s2 = inlined_call_operand.vmem [shape: f32[8,16,1], index: 2, kind: input, shape index: {}]
  %s3 = inlined_call_operand.vmem [shape: f32[128,15], index: 3, kind: output, shape index: {}]
  %s4 = sld [smem:[#allocation0]]
  $region22: #{autoencoder_forward.1} parent=0
    _
  %s6 = ssub.s32 1, %s4
  %s7 = scalar_select 0, %s6, %s4
  // Predicated region
  $region2: #{autoencoder_forward.1} parent=0 // pred_check
    _
  $region3: #{autoencoder_forward.1} parent=0 // pred_check_branch
    %9 = sbr.rel (0) target = $region5
  $region4: #{autoencoder_forward.1} parent=0 // pred_region
    _
  $region5: #{autoencoder_forward.1} parent=0 // pred_fallthru
    _
  // Predicated region
  $region6: #{autoencoder_forward.1} parent=0 // pred_check
    _
  $region7: #{autoencoder_forward.1} parent=0 // pred_check_branch
    %11 = sbr.rel (0) target = $region9
  $region8: #{autoencoder_forward.1} parent=0 // pred_region
    _
  $region9: #{autoencoder_forward.1} parent=0 // pred_fallthru
    _
  // Predicated region
  $region10: #{autoencoder_forward.1} parent=0 // pred_check
    _
  $region11: #{autoencoder_forward.1} parent=0 // pred_check_branch
    %13 = sbr.rel (0) target = $region13
  $region12: #{autoencoder_forward.1} parent=0 // pred_region
    _
  $region13: #{autoencoder_forward.1} parent=0 // pred_fallthru
    _
  %v14 = vld [vmem:[%s0] sm:$0xff]
  %v15 = vld [vmem:[%s0 + $0x8] sm:$0xff]
  %v16 = vld [vmem:[%s0 + $0x10] sm:$0xff]
  %v17 = vld [vmem:[%s0 + $0x18] sm:$0xff]
  %v18 = vld [vmem:[%s0 + $0x20] sm:$0xff]
  %v19 = vld [vmem:[%s0 + $0x28] sm:$0xff]
  %v20 = vld [vmem:[%s0 + $0x30] sm:$0xff]
  %v21 = vld [vmem:[%s0 + $0x38] sm:$0xff]
  %v22 = vld [vmem:[%s0 + $0x40] sm:$0xff]
  %v23 = vld [vmem:[%s0 + $0x48] sm:$0xff]
  %v24 = vld [vmem:[%s0 + $0x50] sm:$0xff]
  %v25 = vld [vmem:[%s0 + $0x58] sm:$0xff]
  %v26 = vld [vmem:[%s0 + $0x60] sm:$0xff]
  %v27 = vld [vmem:[%s0 + $0x68] sm:$0xff]
  %v28 = vld [vmem:[%s0 + $0x70] sm:$0xff]
  %v29 = vld [vmem:[%s0 + $0x78] sm:$0xff]
  %v30 = vld [vmem:[%s1] sm:$0xff]
  %v31 = vld [vmem:[%s2] sm:$0xff]
  %33 = vset.pattern.permute.xlu0 0
  %34 = vperm.xlu0 %33, %v31
  %v35 = vpop.permute.xlu0 %34
  %vm37 = vcmask 121856
  %v39 = vsel %vm37, %v30, 0
  %v42 = vsel %vm37, %v14, 0
  %v45 = vsel %vm37, %v15, 0
  %v48 = vsel %vm37, %v16, 0
  %v51 = vsel %vm37, %v17, 0
  %v54 = vsel %vm37, %v18, 0
  %v57 = vsel %vm37, %v19, 0
  %v60 = vsel %vm37, %v20, 0
  %v63 = vsel %vm37, %v21, 0
  %v66 = vsel %vm37, %v22, 0
  %v69 = vsel %vm37, %v23, 0
  %v72 = vsel %vm37, %v24, 0
  %v75 = vsel %vm37, %v25, 0
  %v78 = vsel %vm37, %v26, 0
  %v81 = vsel %vm37, %v27, 0
  %v84 = vsel %vm37, %v28, 0
  %v87 = vsel %vm37, %v29, 0
  %89 = vmatprep.subr.mxu0 0.0
  %90 = vmatpush1.xpose.msra.mxu0 %v42
  %91 = vmatprep.subr.mxu0 0.0
  %92 = vmatpush1.xpose.msra.mxu0 %v45
  %93 = vmatprep.subr.mxu0 0.0
  %94 = vmatpush1.xpose.msra.mxu0 %v48
  %95 = vmatprep.subr.mxu0 0.0
  %96 = vmatpush1.xpose.msra.mxu0 %v51
  %97 = vmatprep.subr.mxu0 0.0
  %98 = vmatpush1.xpose.msra.mxu0 %v54
  %99 = vmatprep.subr.mxu0 0.0
  %100 = vmatpush1.xpose.msra.mxu0 %v57
  %101 = vmatprep.subr.mxu0 0.0
  %102 = vmatpush1.xpose.msra.mxu0 %v60
  %103 = vmatprep.subr.mxu0 0.0
  %104 = vmatpush1.xpose.msra.mxu0 %v63
  %105 = vmatprep.subr.mxu0 0.0
  %106 = vmatpush1.xpose.msra.mxu0 %v66
  %107 = vmatprep.subr.mxu0 0.0
  %108 = vmatpush1.xpose.msra.mxu0 %v69
  %109 = vmatprep.subr.mxu0 0.0
  %110 = vmatpush1.xpose.msra.mxu0 %v72
  %111 = vmatprep.subr.mxu0 0.0
  %112 = vmatpush1.xpose.msra.mxu0 %v75
  %113 = vmatprep.subr.mxu0 0.0
  %114 = vmatpush1.xpose.msra.mxu0 %v78
  %115 = vmatprep.subr.mxu0 0.0
  %116 = vmatpush1.xpose.msra.mxu0 %v81
  %117 = vmatprep.subr.mxu0 0.0
  %118 = vmatpush1.xpose.msra.mxu0 %v84
  %119 = vmatprep.subr.mxu0 0.0
  %120 = vmatpush1.xpose.msra.mxu0 %v87
  %121 = vmatprep.subr.mxu0 0.0
  %122 = vmatpush1.xpose.msra.mxu0 0.0
  %123 = vmatprep.subr.mxu0 0.0
  %124 = vmatpush1.xpose.msra.mxu0 0.0
  %125 = vmatprep.subr.mxu0 0.0
  %126 = vmatpush1.xpose.msra.mxu0 0.0
  %127 = vmatprep.subr.mxu0 0.0
  %128 = vmatpush1.xpose.msra.mxu0 0.0
  %129 = vmatprep.subr.mxu0 0.0
  %130 = vmatpush1.xpose.msra.mxu0 0.0
  %131 = vmatprep.subr.mxu0 0.0
  %132 = vmatpush1.xpose.msra.mxu0 0.0
  %133 = vmatprep.subr.mxu0 0.0
  %134 = vmatpush1.xpose.msra.mxu0 0.0
  %135 = vmatprep.subr.mxu0 0.0
  %136 = vmatpush1.xpose.msra.mxu0 0.0
  %137 = vmatprep.subr.mxu0 0.0
  %138 = vmatpush1.xpose.msra.mxu0 0.0
  %139 = vmatprep.subr.mxu0 0.0
  %140 = vmatpush1.xpose.msra.mxu0 0.0
  %141 = vmatprep.subr.mxu0 0.0
  %142 = vmatpush1.xpose.msra.mxu0 0.0
  %143 = vmatprep.subr.mxu0 0.0
  %144 = vmatpush1.xpose.msra.mxu0 0.0
  %145 = vmatprep.subr.mxu0 0.0
  %146 = vmatpush1.xpose.msra.mxu0 0.0
  %147 = vmatprep.subr.mxu0 0.0
  %148 = vmatpush1.xpose.msra.mxu0 0.0
  %149 = vmatprep.subr.mxu0 0.0
  %150 = vmatpush1.xpose.msra.mxu0 0.0
  %151 = vmatprep.subr.mxu0 0.0
  %152 = vmatpush1.xpose.msra.mxu0 0.0
  %153 = vmatprep.mubr.f32.mxu0 0.0
  %154 = vmatmul.mubr.f32.gmra.mrb[0].mxu0 %v39
  %v155 = vpop.f32.mrb[0].mxu0
  %v156 = vadd.f32 %v35, %v155
  %v157 = vpop.f32.mrb[0].mxu0
  %158 = vdwg.mxu0
  %v159 = vand.u32 2147483647, %v156
  %vm160 = vcmp.le.f32.partialorder %v159, 0.7853982
  %vm161 = vcmp.lt.s32.totalorder %v156, 0
  %v162 = vand.u32 %v156, 2139095040
  %v163 = vshrl.u32 %v162, 23
  %v164 = vsub.s32 %v163, 127
  %v165 = vand.u32 2147483647, %v156
  %v166 = vand.u32 %v165, 8388607
  %v167 = vor.u32 %v166, 8388608
  %v168 = vsub.s32 0, %v167
  %v169 = vadd.s32 %v164, 1
  %vm170 = vcmp.gt.s32.totalorder %v169, 0
  %v171 = vsel %vm170, %v169, 0
  %v172 = vshrl.u32 %v171, 5
  %v173 = vand.u32 %v171, 31
  %v174 = vsub.s32 32, %v173
  %v175 = vshrl.u32 683565275, %v174
  %v176 = vshll.u32 683565275, %v173
  %v177 = vshrl.u32 2475754826, %v174
  %v178 = vor.u32 %v176, %v177
  %v179 = vshll.u32 2475754826, %v173
  %v180 = vshrl.u32 2131351028, %v174
  %v181 = vor.u32 %v179, %v180
  %v182 = vshll.u32 2131351028, %v173
  %v183 = vshrl.u32 2102212464, %v174
  %v184 = vor.u32 %v182, %v183
  %v185 = vshll.u32 2102212464, %v173
  %v186 = vshrl.u32 920167782, %v174
  %v187 = vor.u32 %v185, %v186
  %v188 = vshll.u32 920167782, %v173
  %v189 = vshrl.u32 1326507024, %v174
  %v190 = vor.u32 %v188, %v189
  %vm191 = vcmp.lt.s32.totalorder %v172, 1
  %vm192 = vcmp.lt.s32.totalorder %v172, 2
  %vm193 = vcmp.lt.s32.totalorder %v172, 3
  %vm194 = vcmp.lt.s32.totalorder %v172, 4
  %v195 = vsel %vm191, %v175, %v178
  %v196 = vsel %vm194, %v184, 2102212464
  %v197 = vsel %vm193, %v181, %v196
  %v198 = vsel %vm192, %v195, %v197
  %v199 = vsel %vm191, %v178, %v181
  %v200 = vsel %vm194, %v187, 920167782
  %v201 = vsel %vm193, %v184, %v200
  %v202 = vsel %vm192, %v199, %v201
  %v203 = vsel %vm191, %v181, %v184
  %v204 = vsel %vm194, %v190, 1326507024
  %v205 = vsel %vm193, %v187, %v204
  %v206 = vsel %vm192, %v203, %v205
  %v207 = vshll.u32 %v167, 8
  %v208 = vmul.u32.u64.compose %v207, %v206
  %v209 = vextract.low.u32 %v208
  %v210 = vextract.high.u32 %v208
  %v211 = vmul.u32.u64.compose %v207, %v202
  %v212 = vextract.low.u32 %v211
  %v213 = vextract.high.u32 %v211
  %v214 = vmul.u32 %v207, %v198
  %v215 = vadd.s32 %v210, %v212
  %vm216 = vc.u32 %v210, %v212
  %v217 = vadd.s32 %v213, 1
  %v218 = vsel %vm216, %v217, %v213
  %v219 = vadd.s32 %v214, %v218
  %v220 = vadd.s32 %v219, 536870912
  %v221 = vshrl.u32 %v220, 30
  %v222 = vshll.u32 %v221, 30
  %v223 = vsub.s32 %v219, %v222
  %vm224 = vcmp.lt.s32.totalorder %v223, 0
  %v225 = vsub.s32 0, %v223
  %v226 = vsel %vm224, %v225, %v223
  %v227 = vclz %v226
  %v228 = vsub.s32 %v227, 2
  %vm229 = vcmp.gt.s32.totalorder 0, %v228
  %v230 = vsel %vm229, 0, %v228
  %v231 = vsub.s32 32, %v230
  %v232 = vshll.u32 %v223, %v230
  %v233 = vshrl.u32 %v215, %v231
  %v234 = vor.u32 %v232, %v233
  %v235 = vsub.s32 4294967266, %v230
  %v236 = vadd.s32 %v235, 127
  %v237 = vshll.u32 %v236, 23
  %v238 = vor.u32 4788187, %v237
  %v239 = vand.u32 2147483647, %v238
  %v241 = vcvt.s32.f32 %v234
  %v242 = vmul.f32 %v241, %v239
  %v243 = vxor.u32 %v242, 2147483648
  %v244 = vsel %vm161, %v243, %v242
  %v245 = vsub.s32 4, %v221
  %v246 = vsel %vm161, %v245, %v221
  %v247 = vsel %vm160, %v156, %v244
  %v248 = vsel %vm160, 0, %v246
  %v249 = vcosq.f32.pop %v247
  %v250 = vsinq.f32.pop %v247
  %vm251 = vweird.f32 %v156
  %v252 = vadd.s32 %v248, 3
  %v253 = vand.u32 %v252, 3
  %vm254 = vcmp.lt.s32.totalorder %v253, 2
  %vm255 = vcmp.eq.s32.totalorder %v253, 0
  %v256 = vxor.u32 %v250, 2147483648
  %v257 = vsel %vm255, %v249, %v256
  %vm258 = vcmp.eq.s32.totalorder %v253, 2
  %v259 = vxor.u32 %v249, 2147483648
  %v260 = vsel %vm258, %v259, %v250
  %v261 = vsel %vm254, %v257, %v260
  %v262 = vsel %vm251, nan, %v261
  %s263 = scalar_lea.vmem %s1, 16
  %v264 = vld [vmem:[%s263] sm:$0xff]
  %s265 = scalar_lea.vmem %s2, 16
  %v266 = vld [vmem:[%s265] sm:$0xff]
  %268 = vset.pattern.permute.xlu0 0
  %269 = vperm.xlu0 %268, %v266
  %v270 = vpop.permute.xlu0 %269
  %vm272 = vcmask 64512
  %v274 = vsel %vm272, %v264, 0
  %276 = vmatprep.subr.mxu0 0.0
  %277 = vmatpush1.msra.mxu0 %v262
  %278 = vmatprep.subr.mxu0 0.0
  %279 = vmatpush1.msra.mxu0 0.0
  %280 = vmatprep.subr.mxu0 0.0
  %281 = vmatpush1.msra.mxu0 0.0
  %282 = vmatprep.subr.mxu0 0.0
  %283 = vmatpush1.msra.mxu0 0.0
  %284 = vmatprep.subr.mxu0 0.0
  %285 = vmatpush1.msra.mxu0 0.0
  %286 = vmatprep.subr.mxu0 0.0
  %287 = vmatpush1.msra.mxu0 0.0
  %288 = vmatprep.subr.mxu0 0.0
  %289 = vmatpush1.msra.mxu0 0.0
  %290 = vmatprep.subr.mxu0 0.0
  %291 = vmatpush1.msra.mxu0 0.0
  %292 = vmatprep.subr.mxu0 0.0
  %293 = vmatpush1.msra.mxu0 0.0
  %294 = vmatprep.subr.mxu0 0.0
  %295 = vmatpush1.msra.mxu0 0.0
  %296 = vmatprep.subr.mxu0 0.0
  %297 = vmatpush1.msra.mxu0 0.0
  %298 = vmatprep.subr.mxu0 0.0
  %299 = vmatpush1.msra.mxu0 0.0
  %300 = vmatprep.subr.mxu0 0.0
  %301 = vmatpush1.msra.mxu0 0.0
  %302 = vmatprep.subr.mxu0 0.0
  %303 = vmatpush1.msra.mxu0 0.0
  %304 = vmatprep.subr.mxu0 0.0
  %305 = vmatpush1.msra.mxu0 0.0
  %306 = vmatprep.subr.mxu0 0.0
  %307 = vmatpush1.msra.mxu0 0.0
  %308 = vmatprep.subr.mxu0 0.0
  %309 = vmatpush1.msra.mxu0 0.0
  %310 = vmatprep.subr.mxu0 0.0
  %311 = vmatpush1.msra.mxu0 0.0
  %312 = vmatprep.subr.mxu0 0.0
  %313 = vmatpush1.msra.mxu0 0.0
  %314 = vmatprep.subr.mxu0 0.0
  %315 = vmatpush1.msra.mxu0 0.0
  %316 = vmatprep.subr.mxu0 0.0
  %317 = vmatpush1.msra.mxu0 0.0
  %318 = vmatprep.subr.mxu0 0.0
  %319 = vmatpush1.msra.mxu0 0.0
  %320 = vmatprep.subr.mxu0 0.0
  %321 = vmatpush1.msra.mxu0 0.0
  %322 = vmatprep.subr.mxu0 0.0
  %323 = vmatpush1.msra.mxu0 0.0
  %324 = vmatprep.subr.mxu0 0.0
  %325 = vmatpush1.msra.mxu0 0.0
  %326 = vmatprep.subr.mxu0 0.0
  %327 = vmatpush1.msra.mxu0 0.0
  %328 = vmatprep.subr.mxu0 0.0
  %329 = vmatpush1.msra.mxu0 0.0
  %330 = vmatprep.subr.mxu0 0.0
  %331 = vmatpush1.msra.mxu0 0.0
  %332 = vmatprep.subr.mxu0 0.0
  %333 = vmatpush1.msra.mxu0 0.0
  %334 = vmatprep.subr.mxu0 0.0
  %335 = vmatpush1.msra.mxu0 0.0
  %336 = vmatprep.subr.mxu0 0.0
  %337 = vmatpush1.msra.mxu0 0.0
  %338 = vmatprep.subr.mxu0 0.0
  %339 = vmatpush1.msra.mxu0 0.0
  %340 = vmatprep.mubr.f32.mxu0 0.0
  %341 = vmatmul.mubr.f32.gmra.mrb[0].mxu0 %v274
  %v342 = vpop.f32.mrb[0].mxu0
  %v343 = vadd.f32 %v270, %v342
  %v344 = vpop.f32.mrb[0].mxu0
  %345 = vdwg.mxu0
  %v346 = vand.u32 2147483647, %v343
  %vm347 = vcmp.le.f32.partialorder %v346, 0.7853982
  %vm348 = vcmp.lt.s32.totalorder %v343, 0
  %v349 = vand.u32 %v343, 2139095040
  %v350 = vshrl.u32 %v349, 23
  %v351 = vsub.s32 %v350, 127
  %v352 = vand.u32 2147483647, %v343
  %v353 = vand.u32 %v352, 8388607
  %v354 = vor.u32 %v353, 8388608
  %v355 = vsub.s32 0, %v354
  %v356 = vadd.s32 %v351, 1
  %vm357 = vcmp.gt.s32.totalorder %v356, 0
  %v358 = vsel %vm357, %v356, 0
  %v359 = vshrl.u32 %v358, 5
  %v360 = vand.u32 %v358, 31
  %v361 = vsub.s32 32, %v360
  %v362 = vshrl.u32 683565275, %v361
  %v363 = vshll.u32 683565275, %v360
  %v364 = vshrl.u32 2475754826, %v361
  %v365 = vor.u32 %v363, %v364
  %v366 = vshll.u32 2475754826, %v360
  %v367 = vshrl.u32 2131351028, %v361
  %v368 = vor.u32 %v366, %v367
  %v369 = vshll.u32 2131351028, %v360
  %v370 = vshrl.u32 2102212464, %v361
  %v371 = vor.u32 %v369, %v370
  %v372 = vshll.u32 2102212464, %v360
  %v373 = vshrl.u32 920167782, %v361
  %v374 = vor.u32 %v372, %v373
  %v375 = vshll.u32 920167782, %v360
  %v376 = vshrl.u32 1326507024, %v361
  %v377 = vor.u32 %v375, %v376
  %vm378 = vcmp.lt.s32.totalorder %v359, 1
  %vm379 = vcmp.lt.s32.totalorder %v359, 2
  %vm380 = vcmp.lt.s32.totalorder %v359, 3
  %vm381 = vcmp.lt.s32.totalorder %v359, 4
  %v382 = vsel %vm378, %v362, %v365
  %v383 = vsel %vm381, %v371, 2102212464
  %v384 = vsel %vm380, %v368, %v383
  %v385 = vsel %vm379, %v382, %v384
  %v386 = vsel %vm378, %v365, %v368
  %v387 = vsel %vm381, %v374, 920167782
  %v388 = vsel %vm380, %v371, %v387
  %v389 = vsel %vm379, %v386, %v388
  %v390 = vsel %vm378, %v368, %v371
  %v391 = vsel %vm381, %v377, 1326507024
  %v392 = vsel %vm380, %v374, %v391
  %v393 = vsel %vm379, %v390, %v392
  %v394 = vshll.u32 %v354, 8
  %v395 = vmul.u32.u64.compose %v394, %v393
  %v396 = vextract.low.u32 %v395
  %v397 = vextract.high.u32 %v395
  %v398 = vmul.u32.u64.compose %v394, %v389
  %v399 = vextract.low.u32 %v398
  %v400 = vextract.high.u32 %v398
  %v401 = vmul.u32 %v394, %v385
  %v402 = vadd.s32 %v397, %v399
  %vm403 = vc.u32 %v397, %v399
  %v404 = vadd.s32 %v400, 1
  %v405 = vsel %vm403, %v404, %v400
  %v406 = vadd.s32 %v401, %v405
  %v407 = vadd.s32 %v406, 536870912
  %v408 = vshrl.u32 %v407, 30
  %v409 = vshll.u32 %v408, 30
  %v410 = vsub.s32 %v406, %v409
  %vm411 = vcmp.lt.s32.totalorder %v410, 0
  %v412 = vsub.s32 0, %v410
  %v413 = vsel %vm411, %v412, %v410
  %v414 = vclz %v413
  %v415 = vsub.s32 %v414, 2
  %vm416 = vcmp.gt.s32.totalorder 0, %v415
  %v417 = vsel %vm416, 0, %v415
  %v418 = vsub.s32 32, %v417
  %v419 = vshll.u32 %v410, %v417
  %v420 = vshrl.u32 %v402, %v418
  %v421 = vor.u32 %v419, %v420
  %v422 = vsub.s32 4294967266, %v417
  %v423 = vadd.s32 %v422, 127
  %v424 = vshll.u32 %v423, 23
  %v425 = vor.u32 4788187, %v424
  %v426 = vand.u32 2147483647, %v425
  %v428 = vcvt.s32.f32 %v421
  %v429 = vmul.f32 %v428, %v426
  %v430 = vxor.u32 %v429, 2147483648
  %v431 = vsel %vm348, %v430, %v429
  %v432 = vsub.s32 4, %v408
  %v433 = vsel %vm348, %v432, %v408
  %v434 = vsel %vm347, %v343, %v431
  %v435 = vsel %vm347, 0, %v433
  %v436 = vcosq.f32.pop %v434
  %v437 = vsinq.f32.pop %v434
  %vm438 = vweird.f32 %v343
  %v439 = vadd.s32 %v435, 3
  %v440 = vand.u32 %v439, 3
  %vm441 = vcmp.lt.s32.totalorder %v440, 2
  %vm442 = vcmp.eq.s32.totalorder %v440, 0
  %v443 = vxor.u32 %v437, 2147483648
  %v444 = vsel %vm442, %v436, %v443
  %vm445 = vcmp.eq.s32.totalorder %v440, 2
  %v446 = vxor.u32 %v436, 2147483648
  %v447 = vsel %vm445, %v446, %v437
  %v448 = vsel %vm441, %v444, %v447
  %v449 = vsel %vm438, nan, %v448
  %s450 = scalar_lea.vmem %s1, 32
  %v451 = vld [vmem:[%s450] sm:$0xff]
  %s452 = scalar_lea.vmem %s2, 32
  %v453 = vld [vmem:[%s452] sm:$0xff]
  %455 = vset.pattern.permute.xlu0 0
  %456 = vperm.xlu0 %455, %v453
  %v457 = vpop.permute.xlu0 %456
  %v460 = vsel %vm272, %v451, 0
  %462 = vmatprep.subr.mxu0 0.0
  %463 = vmatpush1.msra.mxu0 %v449
  %464 = vmatprep.subr.mxu0 0.0
  %465 = vmatpush1.msra.mxu0 0.0
  %466 = vmatprep.subr.mxu0 0.0
  %467 = vmatpush1.msra.mxu0 0.0
  %468 = vmatprep.subr.mxu0 0.0
  %469 = vmatpush1.msra.mxu0 0.0
  %470 = vmatprep.subr.mxu0 0.0
  %471 = vmatpush1.msra.mxu0 0.0
  %472 = vmatprep.subr.mxu0 0.0
  %473 = vmatpush1.msra.mxu0 0.0
  %474 = vmatprep.subr.mxu0 0.0
  %475 = vmatpush1.msra.mxu0 0.0
  %476 = vmatprep.subr.mxu0 0.0
  %477 = vmatpush1.msra.mxu0 0.0
  %478 = vmatprep.subr.mxu0 0.0
  %479 = vmatpush1.msra.mxu0 0.0
  %480 = vmatprep.subr.mxu0 0.0
  %481 = vmatpush1.msra.mxu0 0.0
  %482 = vmatprep.subr.mxu0 0.0
  %483 = vmatpush1.msra.mxu0 0.0
  %484 = vmatprep.subr.mxu0 0.0
  %485 = vmatpush1.msra.mxu0 0.0
  %486 = vmatprep.subr.mxu0 0.0
  %487 = vmatpush1.msra.mxu0 0.0
  %488 = vmatprep.subr.mxu0 0.0
  %489 = vmatpush1.msra.mxu0 0.0
  %490 = vmatprep.subr.mxu0 0.0
  %491 = vmatpush1.msra.mxu0 0.0
  %492 = vmatprep.subr.mxu0 0.0
  %493 = vmatpush1.msra.mxu0 0.0
  %494 = vmatprep.subr.mxu0 0.0
  %495 = vmatpush1.msra.mxu0 0.0
  %496 = vmatprep.subr.mxu0 0.0
  %497 = vmatpush1.msra.mxu0 0.0
  %498 = vmatprep.subr.mxu0 0.0
  %499 = vmatpush1.msra.mxu0 0.0
  %500 = vmatprep.subr.mxu0 0.0
  %501 = vmatpush1.msra.mxu0 0.0
  %502 = vmatprep.subr.mxu0 0.0
  %503 = vmatpush1.msra.mxu0 0.0
  %504 = vmatprep.subr.mxu0 0.0
  %505 = vmatpush1.msra.mxu0 0.0
  %506 = vmatprep.subr.mxu0 0.0
  %507 = vmatpush1.msra.mxu0 0.0
  %508 = vmatprep.subr.mxu0 0.0
  %509 = vmatpush1.msra.mxu0 0.0
  %510 = vmatprep.subr.mxu0 0.0
  %511 = vmatpush1.msra.mxu0 0.0
  %512 = vmatprep.subr.mxu0 0.0
  %513 = vmatpush1.msra.mxu0 0.0
  %514 = vmatprep.subr.mxu0 0.0
  %515 = vmatpush1.msra.mxu0 0.0
  %516 = vmatprep.subr.mxu0 0.0
  %517 = vmatpush1.msra.mxu0 0.0
  %518 = vmatprep.subr.mxu0 0.0
  %519 = vmatpush1.msra.mxu0 0.0
  %520 = vmatprep.subr.mxu0 0.0
  %521 = vmatpush1.msra.mxu0 0.0
  %522 = vmatprep.subr.mxu0 0.0
  %523 = vmatpush1.msra.mxu0 0.0
  %524 = vmatprep.subr.mxu0 0.0
  %525 = vmatpush1.msra.mxu0 0.0
  %526 = vmatprep.mubr.f32.mxu0 0.0
  %527 = vmatmul.mubr.f32.gmra.mrb[0].mxu0 %v460
  %v528 = vpop.f32.mrb[0].mxu0
  %v529 = vadd.f32 %v457, %v528
  %v530 = vpop.f32.mrb[0].mxu0
  %531 = vdwg.mxu0
  %v532 = vand.u32 2147483647, %v529
  %vm533 = vcmp.le.f32.partialorder %v532, 0.7853982
  %vm534 = vcmp.lt.s32.totalorder %v529, 0
  %v535 = vand.u32 %v529, 2139095040
  %v536 = vshrl.u32 %v535, 23
  %v537 = vsub.s32 %v536, 127
  %v538 = vand.u32 2147483647, %v529
  %v539 = vand.u32 %v538, 8388607
  %v540 = vor.u32 %v539, 8388608
  %v541 = vsub.s32 0, %v540
  %v542 = vadd.s32 %v537, 1
  %vm543 = vcmp.gt.s32.totalorder %v542, 0
  %v544 = vsel %vm543, %v542, 0
  %v545 = vshrl.u32 %v544, 5
  %v546 = vand.u32 %v544, 31
  %v547 = vsub.s32 32, %v546
  %v548 = vshrl.u32 683565275, %v547
  %v549 = vshll.u32 683565275, %v546
  %v550 = vshrl.u32 2475754826, %v547
  %v551 = vor.u32 %v549, %v550
  %v552 = vshll.u32 2475754826, %v546
  %v553 = vshrl.u32 2131351028, %v547
  %v554 = vor.u32 %v552, %v553
  %v555 = vshll.u32 2131351028, %v546
  %v556 = vshrl.u32 2102212464, %v547
  %v557 = vor.u32 %v555, %v556
  %v558 = vshll.u32 2102212464, %v546
  %v559 = vshrl.u32 920167782, %v547
  %v560 = vor.u32 %v558, %v559
  %v561 = vshll.u32 920167782, %v546
  %v562 = vshrl.u32 1326507024, %v547
  %v563 = vor.u32 %v561, %v562
  %vm564 = vcmp.lt.s32.totalorder %v545, 1
  %vm565 = vcmp.lt.s32.totalorder %v545, 2
  %vm566 = vcmp.lt.s32.totalorder %v545, 3
  %vm567 = vcmp.lt.s32.totalorder %v545, 4
  %v568 = vsel %vm564, %v548, %v551
  %v569 = vsel %vm567, %v557, 2102212464
  %v570 = vsel %vm566, %v554, %v569
  %v571 = vsel %vm565, %v568, %v570
  %v572 = vsel %vm564, %v551, %v554
  %v573 = vsel %vm567, %v560, 920167782
  %v574 = vsel %vm566, %v557, %v573
  %v575 = vsel %vm565, %v572, %v574
  %v576 = vsel %vm564, %v554, %v557
  %v577 = vsel %vm567, %v563, 1326507024
  %v578 = vsel %vm566, %v560, %v577
  %v579 = vsel %vm565, %v576, %v578
  %v580 = vshll.u32 %v540, 8
  %v581 = vmul.u32.u64.compose %v580, %v579
  %v582 = vextract.low.u32 %v581
  %v583 = vextract.high.u32 %v581
  %v584 = vmul.u32.u64.compose %v580, %v575
  %v585 = vextract.low.u32 %v584
  %v586 = vextract.high.u32 %v584
  %v587 = vmul.u32 %v580, %v571
  %v588 = vadd.s32 %v583, %v585
  %vm589 = vc.u32 %v583, %v585
  %v590 = vadd.s32 %v586, 1
  %v591 = vsel %vm589, %v590, %v586
  %v592 = vadd.s32 %v587, %v591
  %v593 = vadd.s32 %v592, 536870912
  %v594 = vshrl.u32 %v593, 30
  %v595 = vshll.u32 %v594, 30
  %v596 = vsub.s32 %v592, %v595
  %vm597 = vcmp.lt.s32.totalorder %v596, 0
  %v598 = vsub.s32 0, %v596
  %v599 = vsel %vm597, %v598, %v596
  %v600 = vclz %v599
  %v601 = vsub.s32 %v600, 2
  %vm602 = vcmp.gt.s32.totalorder 0, %v601
  %v603 = vsel %vm602, 0, %v601
  %v604 = vsub.s32 32, %v603
  %v605 = vshll.u32 %v596, %v603
  %v606 = vshrl.u32 %v588, %v604
  %v607 = vor.u32 %v605, %v606
  %v608 = vsub.s32 4294967266, %v603
  %v609 = vadd.s32 %v608, 127
  %v610 = vshll.u32 %v609, 23
  %v611 = vor.u32 4788187, %v610
  %v612 = vand.u32 2147483647, %v611
  %v614 = vcvt.s32.f32 %v607
  %v615 = vmul.f32 %v614, %v612
  %v616 = vxor.u32 %v615, 2147483648
  %v617 = vsel %vm534, %v616, %v615
  %v618 = vsub.s32 4, %v594
  %v619 = vsel %vm534, %v618, %v594
  %v620 = vsel %vm533, %v529, %v617
  %v621 = vsel %vm533, 0, %v619
  %v622 = vcosq.f32.pop %v620
  %v623 = vsinq.f32.pop %v620
  %vm624 = vweird.f32 %v529
  %v625 = vadd.s32 %v621, 3
  %v626 = vand.u32 %v625, 3
  %vm627 = vcmp.lt.s32.totalorder %v626, 2
  %vm628 = vcmp.eq.s32.totalorder %v626, 0
  %v629 = vxor.u32 %v623, 2147483648
  %v630 = vsel %vm628, %v622, %v629
  %vm631 = vcmp.eq.s32.totalorder %v626, 2
  %v632 = vxor.u32 %v622, 2147483648
  %v633 = vsel %vm631, %v632, %v623
  %v634 = vsel %vm627, %v630, %v633
  %v635 = vsel %vm624, nan, %v634
  %s636 = scalar_lea.vmem %s1, 48
  %v637 = vld [vmem:[%s636] sm:$0xff]
  %s638 = scalar_lea.vmem %s2, 48
  %v639 = vld [vmem:[%s638] sm:$0xff]
  %641 = vset.pattern.permute.xlu0 0
  %642 = vperm.xlu0 %641, %v639
  %v643 = vpop.permute.xlu0 %642
  %v646 = vsel %vm272, %v637, 0
  %648 = vmatprep.subr.mxu0 0.0
  %649 = vmatpush1.msra.mxu0 %v635
  %650 = vmatprep.subr.mxu0 0.0
  %651 = vmatpush1.msra.mxu0 0.0
  %652 = vmatprep.subr.mxu0 0.0
  %653 = vmatpush1.msra.mxu0 0.0
  %654 = vmatprep.subr.mxu0 0.0
  %655 = vmatpush1.msra.mxu0 0.0
  %656 = vmatprep.subr.mxu0 0.0
  %657 = vmatpush1.msra.mxu0 0.0
  %658 = vmatprep.subr.mxu0 0.0
  %659 = vmatpush1.msra.mxu0 0.0
  %660 = vmatprep.subr.mxu0 0.0
  %661 = vmatpush1.msra.mxu0 0.0
  %662 = vmatprep.subr.mxu0 0.0
  %663 = vmatpush1.msra.mxu0 0.0
  %664 = vmatprep.subr.mxu0 0.0
  %665 = vmatpush1.msra.mxu0 0.0
  %666 = vmatprep.subr.mxu0 0.0
  %667 = vmatpush1.msra.mxu0 0.0
  %668 = vmatprep.subr.mxu0 0.0
  %669 = vmatpush1.msra.mxu0 0.0
  %670 = vmatprep.subr.mxu0 0.0
  %671 = vmatpush1.msra.mxu0 0.0
  %672 = vmatprep.subr.mxu0 0.0
  %673 = vmatpush1.msra.mxu0 0.0
  %674 = vmatprep.subr.mxu0 0.0
  %675 = vmatpush1.msra.mxu0 0.0
  %676 = vmatprep.subr.mxu0 0.0
  %677 = vmatpush1.msra.mxu0 0.0
  %678 = vmatprep.subr.mxu0 0.0
  %679 = vmatpush1.msra.mxu0 0.0
  %680 = vmatprep.subr.mxu0 0.0
  %681 = vmatpush1.msra.mxu0 0.0
  %682 = vmatprep.subr.mxu0 0.0
  %683 = vmatpush1.msra.mxu0 0.0
  %684 = vmatprep.subr.mxu0 0.0
  %685 = vmatpush1.msra.mxu0 0.0
  %686 = vmatprep.subr.mxu0 0.0
  %687 = vmatpush1.msra.mxu0 0.0
  %688 = vmatprep.subr.mxu0 0.0
  %689 = vmatpush1.msra.mxu0 0.0
  %690 = vmatprep.subr.mxu0 0.0
  %691 = vmatpush1.msra.mxu0 0.0
  %692 = vmatprep.subr.mxu0 0.0
  %693 = vmatpush1.msra.mxu0 0.0
  %694 = vmatprep.subr.mxu0 0.0
  %695 = vmatpush1.msra.mxu0 0.0
  %696 = vmatprep.subr.mxu0 0.0
  %697 = vmatpush1.msra.mxu0 0.0
  %698 = vmatprep.subr.mxu0 0.0
  %699 = vmatpush1.msra.mxu0 0.0
  %700 = vmatprep.subr.mxu0 0.0
  %701 = vmatpush1.msra.mxu0 0.0
  %702 = vmatprep.subr.mxu0 0.0
  %703 = vmatpush1.msra.mxu0 0.0
  %704 = vmatprep.subr.mxu0 0.0
  %705 = vmatpush1.msra.mxu0 0.0
  %706 = vmatprep.subr.mxu0 0.0
  %707 = vmatpush1.msra.mxu0 0.0
  %708 = vmatprep.subr.mxu0 0.0
  %709 = vmatpush1.msra.mxu0 0.0
  %710 = vmatprep.subr.mxu0 0.0
  %711 = vmatpush1.msra.mxu0 0.0
  %712 = vmatprep.mubr.f32.mxu0 0.0
  %713 = vmatmul.mubr.f32.gmra.mrb[0].mxu0 %v646
  %v714 = vpop.f32.mrb[0].mxu0
  %v715 = vadd.f32 %v643, %v714
  %v716 = vpop.f32.mrb[0].mxu0
  %717 = vdwg.mxu0
  %v718 = vand.u32 2147483647, %v715
  %vm719 = vcmp.le.f32.partialorder %v718, 0.7853982
  %vm720 = vcmp.lt.s32.totalorder %v715, 0
  %v721 = vand.u32 %v715, 2139095040
  %v722 = vshrl.u32 %v721, 23
  %v723 = vsub.s32 %v722, 127
  %v724 = vand.u32 2147483647, %v715
  %v725 = vand.u32 %v724, 8388607
  %v726 = vor.u32 %v725, 8388608
  %v727 = vsub.s32 0, %v726
  %v728 = vadd.s32 %v723, 1
  %vm729 = vcmp.gt.s32.totalorder %v728, 0
  %v730 = vsel %vm729, %v728, 0
  %v731 = vshrl.u32 %v730, 5
  %v732 = vand.u32 %v730, 31
  %v733 = vsub.s32 32, %v732
  %v734 = vshrl.u32 683565275, %v733
  %v735 = vshll.u32 683565275, %v732
  %v736 = vshrl.u32 2475754826, %v733
  %v737 = vor.u32 %v735, %v736
  %v738 = vshll.u32 2475754826, %v732
  %v739 = vshrl.u32 2131351028, %v733
  %v740 = vor.u32 %v738, %v739
  %v741 = vshll.u32 2131351028, %v732
  %v742 = vshrl.u32 2102212464, %v733
  %v743 = vor.u32 %v741, %v742
  %v744 = vshll.u32 2102212464, %v732
  %v745 = vshrl.u32 920167782, %v733
  %v746 = vor.u32 %v744, %v745
  %v747 = vshll.u32 920167782, %v732
  %v748 = vshrl.u32 1326507024, %v733
  %v749 = vor.u32 %v747, %v748
  %vm750 = vcmp.lt.s32.totalorder %v731, 1
  %vm751 = vcmp.lt.s32.totalorder %v731, 2
  %vm752 = vcmp.lt.s32.totalorder %v731, 3
  %vm753 = vcmp.lt.s32.totalorder %v731, 4
  %v754 = vsel %vm750, %v734, %v737
  %v755 = vsel %vm753, %v743, 2102212464
  %v756 = vsel %vm752, %v740, %v755
  %v757 = vsel %vm751, %v754, %v756
  %v758 = vsel %vm750, %v737, %v740
  %v759 = vsel %vm753, %v746, 920167782
  %v760 = vsel %vm752, %v743, %v759
  %v761 = vsel %vm751, %v758, %v760
  %v762 = vsel %vm750, %v740, %v743
  %v763 = vsel %vm753, %v749, 1326507024
  %v764 = vsel %vm752, %v746, %v763
  %v765 = vsel %vm751, %v762, %v764
  %v766 = vshll.u32 %v726, 8
  %v767 = vmul.u32.u64.compose %v766, %v765
  %v768 = vextract.low.u32 %v767
  %v769 = vextract.high.u32 %v767
  %v770 = vmul.u32.u64.compose %v766, %v761
  %v771 = vextract.low.u32 %v770
  %v772 = vextract.high.u32 %v770
  %v773 = vmul.u32 %v766, %v757
  %v774 = vadd.s32 %v769, %v771
  %vm775 = vc.u32 %v769, %v771
  %v776 = vadd.s32 %v772, 1
  %v777 = vsel %vm775, %v776, %v772
  %v778 = vadd.s32 %v773, %v777
  %v779 = vadd.s32 %v778, 536870912
  %v780 = vshrl.u32 %v779, 30
  %v781 = vshll.u32 %v780, 30
  %v782 = vsub.s32 %v778, %v781
  %vm783 = vcmp.lt.s32.totalorder %v782, 0
  %v784 = vsub.s32 0, %v782
  %v785 = vsel %vm783, %v784, %v782
  %v786 = vclz %v785
  %v787 = vsub.s32 %v786, 2
  %vm788 = vcmp.gt.s32.totalorder 0, %v787
  %v789 = vsel %vm788, 0, %v787
  %v790 = vsub.s32 32, %v789
  %v791 = vshll.u32 %v782, %v789
  %v792 = vshrl.u32 %v774, %v790
  %v793 = vor.u32 %v791, %v792
  %v794 = vsub.s32 4294967266, %v789
  %v795 = vadd.s32 %v794, 127
  %v796 = vshll.u32 %v795, 23
  %v797 = vor.u32 4788187, %v796
  %v798 = vand.u32 2147483647, %v797
  %v800 = vcvt.s32.f32 %v793
  %v801 = vmul.f32 %v800, %v798
  %v802 = vxor.u32 %v801, 2147483648
  %v803 = vsel %vm720, %v802, %v801
  %v804 = vsub.s32 4, %v780
  %v805 = vsel %vm720, %v804, %v780
  %v806 = vsel %vm719, %v715, %v803
  %v807 = vsel %vm719, 0, %v805
  %v808 = vcosq.f32.pop %v806
  %v809 = vsinq.f32.pop %v806
  %vm810 = vweird.f32 %v715
  %v811 = vadd.s32 %v807, 3
  %v812 = vand.u32 %v811, 3
  %vm813 = vcmp.lt.s32.totalorder %v812, 2
  %vm814 = vcmp.eq.s32.totalorder %v812, 0
  %v815 = vxor.u32 %v809, 2147483648
  %v816 = vsel %vm814, %v808, %v815
  %vm817 = vcmp.eq.s32.totalorder %v812, 2
  %v818 = vxor.u32 %v808, 2147483648
  %v819 = vsel %vm817, %v818, %v809
  %v820 = vsel %vm813, %v816, %v819
  %v821 = vsel %vm810, nan, %v820
  %s822 = scalar_lea.vmem %s1, 64
  %v823 = vld [vmem:[%s822] sm:$0xff]
  %s824 = scalar_lea.vmem %s2, 64
  %v825 = vld [vmem:[%s824] sm:$0xff]
  %827 = vset.pattern.permute.xlu0 0
  %828 = vperm.xlu0 %827, %v825
  %v829 = vpop.permute.xlu0 %828
  %v832 = vsel %vm272, %v823, 0
  %834 = vmatprep.subr.mxu0 0.0
  %835 = vmatpush1.msra.mxu0 %v821
  %836 = vmatprep.subr.mxu0 0.0
  %837 = vmatpush1.msra.mxu0 0.0
  %838 = vmatprep.subr.mxu0 0.0
  %839 = vmatpush1.msra.mxu0 0.0
  %840 = vmatprep.subr.mxu0 0.0
  %841 = vmatpush1.msra.mxu0 0.0
  %842 = vmatprep.subr.mxu0 0.0
  %843 = vmatpush1.msra.mxu0 0.0
  %844 = vmatprep.subr.mxu0 0.0
  %845 = vmatpush1.msra.mxu0 0.0
  %846 = vmatprep.subr.mxu0 0.0
  %847 = vmatpush1.msra.mxu0 0.0
  %848 = vmatprep.subr.mxu0 0.0
  %849 = vmatpush1.msra.mxu0 0.0
  %850 = vmatprep.subr.mxu0 0.0
  %851 = vmatpush1.msra.mxu0 0.0
  %852 = vmatprep.subr.mxu0 0.0
  %853 = vmatpush1.msra.mxu0 0.0
  %854 = vmatprep.subr.mxu0 0.0
  %855 = vmatpush1.msra.mxu0 0.0
  %856 = vmatprep.subr.mxu0 0.0
  %857 = vmatpush1.msra.mxu0 0.0
  %858 = vmatprep.subr.mxu0 0.0
  %859 = vmatpush1.msra.mxu0 0.0
  %860 = vmatprep.subr.mxu0 0.0
  %861 = vmatpush1.msra.mxu0 0.0
  %862 = vmatprep.subr.mxu0 0.0
  %863 = vmatpush1.msra.mxu0 0.0
  %864 = vmatprep.subr.mxu0 0.0
  %865 = vmatpush1.msra.mxu0 0.0
  %866 = vmatprep.subr.mxu0 0.0
  %867 = vmatpush1.msra.mxu0 0.0
  %868 = vmatprep.subr.mxu0 0.0
  %869 = vmatpush1.msra.mxu0 0.0
  %870 = vmatprep.subr.mxu0 0.0
  %871 = vmatpush1.msra.mxu0 0.0
  %872 = vmatprep.subr.mxu0 0.0
  %873 = vmatpush1.msra.mxu0 0.0
  %874 = vmatprep.subr.mxu0 0.0
  %875 = vmatpush1.msra.mxu0 0.0
  %876 = vmatprep.subr.mxu0 0.0
  %877 = vmatpush1.msra.mxu0 0.0
  %878 = vmatprep.subr.mxu0 0.0
  %879 = vmatpush1.msra.mxu0 0.0
  %880 = vmatprep.subr.mxu0 0.0
  %881 = vmatpush1.msra.mxu0 0.0
  %882 = vmatprep.subr.mxu0 0.0
  %883 = vmatpush1.msra.mxu0 0.0
  %884 = vmatprep.subr.mxu0 0.0
  %885 = vmatpush1.msra.mxu0 0.0
  %886 = vmatprep.subr.mxu0 0.0
  %887 = vmatpush1.msra.mxu0 0.0
  %888 = vmatprep.subr.mxu0 0.0
  %889 = vmatpush1.msra.mxu0 0.0
  %890 = vmatprep.subr.mxu0 0.0
  %891 = vmatpush1.msra.mxu0 0.0
  %892 = vmatprep.subr.mxu0 0.0
  %893 = vmatpush1.msra.mxu0 0.0
  %894 = vmatprep.subr.mxu0 0.0
  %895 = vmatpush1.msra.mxu0 0.0
  %896 = vmatprep.subr.mxu0 0.0
  %897 = vmatpush1.msra.mxu0 0.0
  %898 = vmatprep.mubr.f32.mxu0 0.0
  %899 = vmatmul.mubr.f32.gmra.mrb[0].mxu0 %v832
  %v900 = vpop.f32.mrb[0].mxu0
  %v901 = vadd.f32 %v829, %v900
  %v902 = vpop.f32.mrb[0].mxu0
  %903 = vdwg.mxu0
  %v904 = vand.u32 2147483647, %v901
  %vm905 = vcmp.le.f32.partialorder %v904, 0.7853982
  %vm906 = vcmp.lt.s32.totalorder %v901, 0
  %v907 = vand.u32 %v901, 2139095040
  %v908 = vshrl.u32 %v907, 23
  %v909 = vsub.s32 %v908, 127
  %v910 = vand.u32 2147483647, %v901
  %v911 = vand.u32 %v910, 8388607
  %v912 = vor.u32 %v911, 8388608
  %v913 = vsub.s32 0, %v912
  %v914 = vadd.s32 %v909, 1
  %vm915 = vcmp.gt.s32.totalorder %v914, 0
  %v916 = vsel %vm915, %v914, 0
  %v917 = vshrl.u32 %v916, 5
  %v918 = vand.u32 %v916, 31
  %v919 = vsub.s32 32, %v918
  %v920 = vshrl.u32 683565275, %v919
  %v921 = vshll.u32 683565275, %v918
  %v922 = vshrl.u32 2475754826, %v919
  %v923 = vor.u32 %v921, %v922
  %v924 = vshll.u32 2475754826, %v918
  %v925 = vshrl.u32 2131351028, %v919
  %v926 = vor.u32 %v924, %v925
  %v927 = vshll.u32 2131351028, %v918
  %v928 = vshrl.u32 2102212464, %v919
  %v929 = vor.u32 %v927, %v928
  %v930 = vshll.u32 2102212464, %v918
  %v931 = vshrl.u32 920167782, %v919
  %v932 = vor.u32 %v930, %v931
  %v933 = vshll.u32 920167782, %v918
  %v934 = vshrl.u32 1326507024, %v919
  %v935 = vor.u32 %v933, %v934
  %vm936 = vcmp.lt.s32.totalorder %v917, 1
  %vm937 = vcmp.lt.s32.totalorder %v917, 2
  %vm938 = vcmp.lt.s32.totalorder %v917, 3
  %vm939 = vcmp.lt.s32.totalorder %v917, 4
  %v940 = vsel %vm936, %v920, %v923
  %v941 = vsel %vm939, %v929, 2102212464
  %v942 = vsel %vm938, %v926, %v941
  %v943 = vsel %vm937, %v940, %v942
  %v944 = vsel %vm936, %v923, %v926
  %v945 = vsel %vm939, %v932, 920167782
  %v946 = vsel %vm938, %v929, %v945
  %v947 = vsel %vm937, %v944, %v946
  %v948 = vsel %vm936, %v926, %v929
  %v949 = vsel %vm939, %v935, 1326507024
  %v950 = vsel %vm938, %v932, %v949
  %v951 = vsel %vm937, %v948, %v950
  %v952 = vshll.u32 %v912, 8
  %v953 = vmul.u32.u64.compose %v952, %v951
  %v954 = vextract.low.u32 %v953
  %v955 = vextract.high.u32 %v953
  %v956 = vmul.u32.u64.compose %v952, %v947
  %v957 = vextract.low.u32 %v956
  %v958 = vextract.high.u32 %v956
  %v959 = vmul.u32 %v952, %v943
  %v960 = vadd.s32 %v955, %v957
  %vm961 = vc.u32 %v955, %v957
  %v962 = vadd.s32 %v958, 1
  %v963 = vsel %vm961, %v962, %v958
  %v964 = vadd.s32 %v959, %v963
  %v965 = vadd.s32 %v964, 536870912
  %v966 = vshrl.u32 %v965, 30
  %v967 = vshll.u32 %v966, 30
  %v968 = vsub.s32 %v964, %v967
  %vm969 = vcmp.lt.s32.totalorder %v968, 0
  %v970 = vsub.s32 0, %v968
  %v971 = vsel %vm969, %v970, %v968
  %v972 = vclz %v971
  %v973 = vsub.s32 %v972, 2
  %vm974 = vcmp.gt.s32.totalorder 0, %v973
  %v975 = vsel %vm974, 0, %v973
  %v976 = vsub.s32 32, %v975
  %v977 = vshll.u32 %v968, %v975
  %v978 = vshrl.u32 %v960, %v976
  %v979 = vor.u32 %v977, %v978
  %v980 = vsub.s32 4294967266, %v975
  %v981 = vadd.s32 %v980, 127
  %v982 = vshll.u32 %v981, 23
  %v983 = vor.u32 4788187, %v982
  %v984 = vand.u32 2147483647, %v983
  %v986 = vcvt.s32.f32 %v979
  %v987 = vmul.f32 %v986, %v984
  %v988 = vxor.u32 %v987, 2147483648
  %v989 = vsel %vm906, %v988, %v987
  %v990 = vsub.s32 4, %v966
  %v991 = vsel %vm906, %v990, %v966
  %v992 = vsel %vm905, %v901, %v989
  %v993 = vsel %vm905, 0, %v991
  %v994 = vcosq.f32.pop %v992
  %v995 = vsinq.f32.pop %v992
  %vm996 = vweird.f32 %v901
  %v997 = vadd.s32 %v993, 3
  %v998 = vand.u32 %v997, 3
  %vm999 = vcmp.lt.s32.totalorder %v998, 2
  %vm1000 = vcmp.eq.s32.totalorder %v998, 0
  %v1001 = vxor.u32 %v995, 2147483648
  %v1002 = vsel %vm1000, %v994, %v1001
  %vm1003 = vcmp.eq.s32.totalorder %v998, 2
  %v1004 = vxor.u32 %v994, 2147483648
  %v1005 = vsel %vm1003, %v1004, %v995
  %v1006 = vsel %vm999, %v1002, %v1005
  %v1007 = vsel %vm996, nan, %v1006
  %s1008 = scalar_lea.vmem %s1, 80
  %v1009 = vld [vmem:[%s1008] sm:$0xff]
  %s1010 = scalar_lea.vmem %s2, 80
  %v1011 = vld [vmem:[%s1010] sm:$0xff]
  %1013 = vset.pattern.permute.xlu0 0
  %1014 = vperm.xlu0 %1013, %v1011
  %v1015 = vpop.permute.xlu0 %1014
  %v1018 = vsel %vm272, %v1009, 0
  %1020 = vmatprep.subr.mxu0 0.0
  %1021 = vmatpush1.msra.mxu0 %v1007
  %1022 = vmatprep.subr.mxu0 0.0
  %1023 = vmatpush1.msra.mxu0 0.0
  %1024 = vmatprep.subr.mxu0 0.0
  %1025 = vmatpush1.msra.mxu0 0.0
  %1026 = vmatprep.subr.mxu0 0.0
  %1027 = vmatpush1.msra.mxu0 0.0
  %1028 = vmatprep.subr.mxu0 0.0
  %1029 = vmatpush1.msra.mxu0 0.0
  %1030 = vmatprep.subr.mxu0 0.0
  %1031 = vmatpush1.msra.mxu0 0.0
  %1032 = vmatprep.subr.mxu0 0.0
  %1033 = vmatpush1.msra.mxu0 0.0
  %1034 = vmatprep.subr.mxu0 0.0
  %1035 = vmatpush1.msra.mxu0 0.0
  %1036 = vmatprep.subr.mxu0 0.0
  %1037 = vmatpush1.msra.mxu0 0.0
  %1038 = vmatprep.subr.mxu0 0.0
  %1039 = vmatpush1.msra.mxu0 0.0
  %1040 = vmatprep.subr.mxu0 0.0
  %1041 = vmatpush1.msra.mxu0 0.0
  %1042 = vmatprep.subr.mxu0 0.0
  %1043 = vmatpush1.msra.mxu0 0.0
  %1044 = vmatprep.subr.mxu0 0.0
  %1045 = vmatpush1.msra.mxu0 0.0
  %1046 = vmatprep.subr.mxu0 0.0
  %1047 = vmatpush1.msra.mxu0 0.0
  %1048 = vmatprep.subr.mxu0 0.0
  %1049 = vmatpush1.msra.mxu0 0.0
  %1050 = vmatprep.subr.mxu0 0.0
  %1051 = vmatpush1.msra.mxu0 0.0
  %1052 = vmatprep.subr.mxu0 0.0
  %1053 = vmatpush1.msra.mxu0 0.0
  %1054 = vmatprep.subr.mxu0 0.0
  %1055 = vmatpush1.msra.mxu0 0.0
  %1056 = vmatprep.subr.mxu0 0.0
  %1057 = vmatpush1.msra.mxu0 0.0
  %1058 = vmatprep.subr.mxu0 0.0
  %1059 = vmatpush1.msra.mxu0 0.0
  %1060 = vmatprep.subr.mxu0 0.0
  %1061 = vmatpush1.msra.mxu0 0.0
  %1062 = vmatprep.subr.mxu0 0.0
  %1063 = vmatpush1.msra.mxu0 0.0
  %1064 = vmatprep.subr.mxu0 0.0
  %1065 = vmatpush1.msra.mxu0 0.0
  %1066 = vmatprep.subr.mxu0 0.0
  %1067 = vmatpush1.msra.mxu0 0.0
  %1068 = vmatprep.subr.mxu0 0.0
  %1069 = vmatpush1.msra.mxu0 0.0
  %1070 = vmatprep.subr.mxu0 0.0
  %1071 = vmatpush1.msra.mxu0 0.0
  %1072 = vmatprep.subr.mxu0 0.0
  %1073 = vmatpush1.msra.mxu0 0.0
  %1074 = vmatprep.subr.mxu0 0.0
  %1075 = vmatpush1.msra.mxu0 0.0
  %1076 = vmatprep.subr.mxu0 0.0
  %1077 = vmatpush1.msra.mxu0 0.0
  %1078 = vmatprep.subr.mxu0 0.0
  %1079 = vmatpush1.msra.mxu0 0.0
  %1080 = vmatprep.subr.mxu0 0.0
  %1081 = vmatpush1.msra.mxu0 0.0
  %1082 = vmatprep.subr.mxu0 0.0
  %1083 = vmatpush1.msra.mxu0 0.0
  %1084 = vmatprep.mubr.f32.mxu0 0.0
  %1085 = vmatmul.mubr.f32.gmra.mrb[0].mxu0 %v1018
  %v1086 = vpop.f32.mrb[0].mxu0
  %v1087 = vadd.f32 %v1015, %v1086
  %v1088 = vpop.f32.mrb[0].mxu0
  %1089 = vdwg.mxu0
  %v1090 = vand.u32 2147483647, %v1087
  %vm1091 = vcmp.le.f32.partialorder %v1090, 0.7853982
  %vm1092 = vcmp.lt.s32.totalorder %v1087, 0
  %v1093 = vand.u32 %v1087, 2139095040
  %v1094 = vshrl.u32 %v1093, 23
  %v1095 = vsub.s32 %v1094, 127
  %v1096 = vand.u32 2147483647, %v1087
  %v1097 = vand.u32 %v1096, 8388607
  %v1098 = vor.u32 %v1097, 8388608
  %v1099 = vsub.s32 0, %v1098
  %v1100 = vadd.s32 %v1095, 1
  %vm1101 = vcmp.gt.s32.totalorder %v1100, 0
  %v1102 = vsel %vm1101, %v1100, 0
  %v1103 = vshrl.u32 %v1102, 5
  %v1104 = vand.u32 %v1102, 31
  %v1105 = vsub.s32 32, %v1104
  %v1106 = vshrl.u32 683565275, %v1105
  %v1107 = vshll.u32 683565275, %v1104
  %v1108 = vshrl.u32 2475754826, %v1105
  %v1109 = vor.u32 %v1107, %v1108
  %v1110 = vshll.u32 2475754826, %v1104
  %v1111 = vshrl.u32 2131351028, %v1105
  %v1112 = vor.u32 %v1110, %v1111
  %v1113 = vshll.u32 2131351028, %v1104
  %v1114 = vshrl.u32 2102212464, %v1105
  %v1115 = vor.u32 %v1113, %v1114
  %v1116 = vshll.u32 2102212464, %v1104
  %v1117 = vshrl.u32 920167782, %v1105
  %v1118 = vor.u32 %v1116, %v1117
  %v1119 = vshll.u32 920167782, %v1104
  %v1120 = vshrl.u32 1326507024, %v1105
  %v1121 = vor.u32 %v1119, %v1120
  %vm1122 = vcmp.lt.s32.totalorder %v1103, 1
  %vm1123 = vcmp.lt.s32.totalorder %v1103, 2
  %vm1124 = vcmp.lt.s32.totalorder %v1103, 3
  %vm1125 = vcmp.lt.s32.totalorder %v1103, 4
  %v1126 = vsel %vm1122, %v1106, %v1109
  %v1127 = vsel %vm1125, %v1115, 2102212464
  %v1128 = vsel %vm1124, %v1112, %v1127
  %v1129 = vsel %vm1123, %v1126, %v1128
  %v1130 = vsel %vm1122, %v1109, %v1112
  %v1131 = vsel %vm1125, %v1118, 920167782
  %v1132 = vsel %vm1124, %v1115, %v1131
  %v1133 = vsel %vm1123, %v1130, %v1132
  %v1134 = vsel %vm1122, %v1112, %v1115
  %v1135 = vsel %vm1125, %v1121, 1326507024
  %v1136 = vsel %vm1124, %v1118, %v1135
  %v1137 = vsel %vm1123, %v1134, %v1136
  %v1138 = vshll.u32 %v1098, 8
  %v1139 = vmul.u32.u64.compose %v1138, %v1137
  %v1140 = vextract.low.u32 %v1139
  %v1141 = vextract.high.u32 %v1139
  %v1142 = vmul.u32.u64.compose %v1138, %v1133
  %v1143 = vextract.low.u32 %v1142
  %v1144 = vextract.high.u32 %v1142
  %v1145 = vmul.u32 %v1138, %v1129
  %v1146 = vadd.s32 %v1141, %v1143
  %vm1147 = vc.u32 %v1141, %v1143
  %v1148 = vadd.s32 %v1144, 1
  %v1149 = vsel %vm1147, %v1148, %v1144
  %v1150 = vadd.s32 %v1145, %v1149
  %v1151 = vadd.s32 %v1150, 536870912
  %v1152 = vshrl.u32 %v1151, 30
  %v1153 = vshll.u32 %v1152, 30
  %v1154 = vsub.s32 %v1150, %v1153
  %vm1155 = vcmp.lt.s32.totalorder %v1154, 0
  %v1156 = vsub.s32 0, %v1154
  %v1157 = vsel %vm1155, %v1156, %v1154
  %v1158 = vclz %v1157
  %v1159 = vsub.s32 %v1158, 2
  %vm1160 = vcmp.gt.s32.totalorder 0, %v1159
  %v1161 = vsel %vm1160, 0, %v1159
  %v1162 = vsub.s32 32, %v1161
  %v1163 = vshll.u32 %v1154, %v1161
  %v1164 = vshrl.u32 %v1146, %v1162
  %v1165 = vor.u32 %v1163, %v1164
  %v1166 = vsub.s32 4294967266, %v1161
  %v1167 = vadd.s32 %v1166, 127
  %v1168 = vshll.u32 %v1167, 23
  %v1169 = vor.u32 4788187, %v1168
  %v1170 = vand.u32 2147483647, %v1169
  %v1172 = vcvt.s32.f32 %v1165
  %v1173 = vmul.f32 %v1172, %v1170
  %v1174 = vxor.u32 %v1173, 2147483648
  %v1175 = vsel %vm1092, %v1174, %v1173
  %v1176 = vsub.s32 4, %v1152
  %v1177 = vsel %vm1092, %v1176, %v1152
  %v1178 = vsel %vm1091, %v1087, %v1175
  %v1179 = vsel %vm1091, 0, %v1177
  %v1180 = vcosq.f32.pop %v1178
  %v1181 = vsinq.f32.pop %v1178
  %vm1182 = vweird.f32 %v1087
  %v1183 = vadd.s32 %v1179, 3
  %v1184 = vand.u32 %v1183, 3
  %vm1185 = vcmp.lt.s32.totalorder %v1184, 2
  %vm1186 = vcmp.eq.s32.totalorder %v1184, 0
  %v1187 = vxor.u32 %v1181, 2147483648
  %v1188 = vsel %vm1186, %v1180, %v1187
  %vm1189 = vcmp.eq.s32.totalorder %v1184, 2
  %v1190 = vxor.u32 %v1180, 2147483648
  %v1191 = vsel %vm1189, %v1190, %v1181
  %v1192 = vsel %vm1185, %v1188, %v1191
  %v1193 = vsel %vm1182, nan, %v1192
  %s1194 = scalar_lea.vmem %s1, 96
  %v1195 = vld [vmem:[%s1194] sm:$0xff]
  %s1196 = scalar_lea.vmem %s2, 96
  %v1197 = vld [vmem:[%s1196] sm:$0xff]
  %1199 = vset.pattern.permute.xlu0 0
  %1200 = vperm.xlu0 %1199, %v1197
  %v1201 = vpop.permute.xlu0 %1200
  %v1204 = vsel %vm272, %v1195, 0
  %1206 = vmatprep.subr.mxu0 0.0
  %1207 = vmatpush1.msra.mxu0 %v1193
  %1208 = vmatprep.subr.mxu0 0.0
  %1209 = vmatpush1.msra.mxu0 0.0
  %1210 = vmatprep.subr.mxu0 0.0
  %1211 = vmatpush1.msra.mxu0 0.0
  %1212 = vmatprep.subr.mxu0 0.0
  %1213 = vmatpush1.msra.mxu0 0.0
  %1214 = vmatprep.subr.mxu0 0.0
  %1215 = vmatpush1.msra.mxu0 0.0
  %1216 = vmatprep.subr.mxu0 0.0
  %1217 = vmatpush1.msra.mxu0 0.0
  %1218 = vmatprep.subr.mxu0 0.0
  %1219 = vmatpush1.msra.mxu0 0.0
  %1220 = vmatprep.subr.mxu0 0.0
  %1221 = vmatpush1.msra.mxu0 0.0
  %1222 = vmatprep.subr.mxu0 0.0
  %1223 = vmatpush1.msra.mxu0 0.0
  %1224 = vmatprep.subr.mxu0 0.0
  %1225 = vmatpush1.msra.mxu0 0.0
  %1226 = vmatprep.subr.mxu0 0.0
  %1227 = vmatpush1.msra.mxu0 0.0
  %1228 = vmatprep.subr.mxu0 0.0
  %1229 = vmatpush1.msra.mxu0 0.0
  %1230 = vmatprep.subr.mxu0 0.0
  %1231 = vmatpush1.msra.mxu0 0.0
  %1232 = vmatprep.subr.mxu0 0.0
  %1233 = vmatpush1.msra.mxu0 0.0
  %1234 = vmatprep.subr.mxu0 0.0
  %1235 = vmatpush1.msra.mxu0 0.0
  %1236 = vmatprep.subr.mxu0 0.0
  %1237 = vmatpush1.msra.mxu0 0.0
  %1238 = vmatprep.subr.mxu0 0.0
  %1239 = vmatpush1.msra.mxu0 0.0
  %1240 = vmatprep.subr.mxu0 0.0
  %1241 = vmatpush1.msra.mxu0 0.0
  %1242 = vmatprep.subr.mxu0 0.0
  %1243 = vmatpush1.msra.mxu0 0.0
  %1244 = vmatprep.subr.mxu0 0.0
  %1245 = vmatpush1.msra.mxu0 0.0
  %1246 = vmatprep.subr.mxu0 0.0
  %1247 = vmatpush1.msra.mxu0 0.0
  %1248 = vmatprep.subr.mxu0 0.0
  %1249 = vmatpush1.msra.mxu0 0.0
  %1250 = vmatprep.subr.mxu0 0.0
  %1251 = vmatpush1.msra.mxu0 0.0
  %1252 = vmatprep.subr.mxu0 0.0
  %1253 = vmatpush1.msra.mxu0 0.0
  %1254 = vmatprep.subr.mxu0 0.0
  %1255 = vmatpush1.msra.mxu0 0.0
  %1256 = vmatprep.subr.mxu0 0.0
  %1257 = vmatpush1.msra.mxu0 0.0
  %1258 = vmatprep.subr.mxu0 0.0
  %1259 = vmatpush1.msra.mxu0 0.0
  %1260 = vmatprep.subr.mxu0 0.0
  %1261 = vmatpush1.msra.mxu0 0.0
  %1262 = vmatprep.subr.mxu0 0.0
  %1263 = vmatpush1.msra.mxu0 0.0
  %1264 = vmatprep.subr.mxu0 0.0
  %1265 = vmatpush1.msra.mxu0 0.0
  %1266 = vmatprep.subr.mxu0 0.0
  %1267 = vmatpush1.msra.mxu0 0.0
  %1268 = vmatprep.subr.mxu0 0.0
  %1269 = vmatpush1.msra.mxu0 0.0
  %1270 = vmatprep.mubr.f32.mxu0 0.0
  %1271 = vmatmul.mubr.f32.gmra.mrb[0].mxu0 %v1204
  %v1272 = vpop.f32.mrb[0].mxu0
  %v1273 = vadd.f32 %v1201, %v1272
  %v1274 = vpop.f32.mrb[0].mxu0
  %1275 = vdwg.mxu0
  %v1276 = vand.u32 2147483647, %v1273
  %vm1277 = vcmp.le.f32.partialorder %v1276, 0.7853982
  %vm1278 = vcmp.lt.s32.totalorder %v1273, 0
  %v1279 = vand.u32 %v1273, 2139095040
  %v1280 = vshrl.u32 %v1279, 23
  %v1281 = vsub.s32 %v1280, 127
  %v1282 = vand.u32 2147483647, %v1273
  %v1283 = vand.u32 %v1282, 8388607
  %v1284 = vor.u32 %v1283, 8388608
  %v1285 = vsub.s32 0, %v1284
  %v1286 = vadd.s32 %v1281, 1
  %vm1287 = vcmp.gt.s32.totalorder %v1286, 0
  %v1288 = vsel %vm1287, %v1286, 0
  %v1289 = vshrl.u32 %v1288, 5
  %v1290 = vand.u32 %v1288, 31
  %v1291 = vsub.s32 32, %v1290
  %v1292 = vshrl.u32 683565275, %v1291
  %v1293 = vshll.u32 683565275, %v1290
  %v1294 = vshrl.u32 2475754826, %v1291
  %v1295 = vor.u32 %v1293, %v1294
  %v1296 = vshll.u32 2475754826, %v1290
  %v1297 = vshrl.u32 2131351028, %v1291
  %v1298 = vor.u32 %v1296, %v1297
  %v1299 = vshll.u32 2131351028, %v1290
  %v1300 = vshrl.u32 2102212464, %v1291
  %v1301 = vor.u32 %v1299, %v1300
  %v1302 = vshll.u32 2102212464, %v1290
  %v1303 = vshrl.u32 920167782, %v1291
  %v1304 = vor.u32 %v1302, %v1303
  %v1305 = vshll.u32 920167782, %v1290
  %v1306 = vshrl.u32 1326507024, %v1291
  %v1307 = vor.u32 %v1305, %v1306
  %vm1308 = vcmp.lt.s32.totalorder %v1289, 1
  %vm1309 = vcmp.lt.s32.totalorder %v1289, 2
  %vm1310 = vcmp.lt.s32.totalorder %v1289, 3
  %vm1311 = vcmp.lt.s32.totalorder %v1289, 4
  %v1312 = vsel %vm1308, %v1292, %v1295
  %v1313 = vsel %vm1311, %v1301, 2102212464
  %v1314 = vsel %vm1310, %v1298, %v1313
  %v1315 = vsel %vm1309, %v1312, %v1314
  %v1316 = vsel %vm1308, %v1295, %v1298
  %v1317 = vsel %vm1311, %v1304, 920167782
  %v1318 = vsel %vm1310, %v1301, %v1317
  %v1319 = vsel %vm1309, %v1316, %v1318
  %v1320 = vsel %vm1308, %v1298, %v1301
  %v1321 = vsel %vm1311, %v1307, 1326507024
  %v1322 = vsel %vm1310, %v1304, %v1321
  %v1323 = vsel %vm1309, %v1320, %v1322
  %v1324 = vshll.u32 %v1284, 8
  %v1325 = vmul.u32.u64.compose %v1324, %v1323
  %v1326 = vextract.low.u32 %v1325
  %v1327 = vextract.high.u32 %v1325
  %v1328 = vmul.u32.u64.compose %v1324, %v1319
  %v1329 = vextract.low.u32 %v1328
  %v1330 = vextract.high.u32 %v1328
  %v1331 = vmul.u32 %v1324, %v1315
  %v1332 = vadd.s32 %v1327, %v1329
  %vm1333 = vc.u32 %v1327, %v1329
  %v1334 = vadd.s32 %v1330, 1
  %v1335 = vsel %vm1333, %v1334, %v1330
  %v1336 = vadd.s32 %v1331, %v1335
  %v1337 = vadd.s32 %v1336, 536870912
  %v1338 = vshrl.u32 %v1337, 30
  %v1339 = vshll.u32 %v1338, 30
  %v1340 = vsub.s32 %v1336, %v1339
  %vm1341 = vcmp.lt.s32.totalorder %v1340, 0
  %v1342 = vsub.s32 0, %v1340
  %v1343 = vsel %vm1341, %v1342, %v1340
  %v1344 = vclz %v1343
  %v1345 = vsub.s32 %v1344, 2
  %vm1346 = vcmp.gt.s32.totalorder 0, %v1345
  %v1347 = vsel %vm1346, 0, %v1345
  %v1348 = vsub.s32 32, %v1347
  %v1349 = vshll.u32 %v1340, %v1347
  %v1350 = vshrl.u32 %v1332, %v1348
  %v1351 = vor.u32 %v1349, %v1350
  %v1352 = vsub.s32 4294967266, %v1347
  %v1353 = vadd.s32 %v1352, 127
  %v1354 = vshll.u32 %v1353, 23
  %v1355 = vor.u32 4788187, %v1354
  %v1356 = vand.u32 2147483647, %v1355
  %v1358 = vcvt.s32.f32 %v1351
  %v1359 = vmul.f32 %v1358, %v1356
  %v1360 = vxor.u32 %v1359, 2147483648
  %v1361 = vsel %vm1278, %v1360, %v1359
  %v1362 = vsub.s32 4, %v1338
  %v1363 = vsel %vm1278, %v1362, %v1338
  %v1364 = vsel %vm1277, %v1273, %v1361
  %v1365 = vsel %vm1277, 0, %v1363
  %v1366 = vcosq.f32.pop %v1364
  %v1367 = vsinq.f32.pop %v1364
  %vm1368 = vweird.f32 %v1273
  %v1369 = vadd.s32 %v1365, 3
  %v1370 = vand.u32 %v1369, 3
  %vm1371 = vcmp.lt.s32.totalorder %v1370, 2
  %vm1372 = vcmp.eq.s32.totalorder %v1370, 0
  %v1373 = vxor.u32 %v1367, 2147483648
  %v1374 = vsel %vm1372, %v1366, %v1373
  %vm1375 = vcmp.eq.s32.totalorder %v1370, 2
  %v1376 = vxor.u32 %v1366, 2147483648
  %v1377 = vsel %vm1375, %v1376, %v1367
  %v1378 = vsel %vm1371, %v1374, %v1377
  %v1379 = vsel %vm1368, nan, %v1378
  %s1380 = scalar_lea.vmem %s1, 112
  %v1381 = vld [vmem:[%s1380] sm:$0xff]
  %v1382 = vld [vmem:[%s1380 + $0x8] sm:$0xff]
  %s1383 = scalar_lea.vmem %s2, 112
  %v1384 = vld [vmem:[%s1383] sm:$0xff]
  %v1385 = vld [vmem:[%s1383 + $0x8] sm:$0xff]
  %1387 = vset.pattern.permute.xlu0 0
  %1388 = vperm.xlu0 %1387, %v1384
  %v1389 = vpop.permute.xlu0 %1388
  %1392 = vset.pattern.permute.xlu0 0
  %1393 = vperm.xlu0 %1392, %v1385
  %v1394 = vpop.permute.xlu0 %1393
  %v1397 = vsel %vm272, %v1381, 0
  %v1400 = vsel %vm272, %v1382, 0
  %1402 = vmatprep.subr.mxu0 0.0
  %1403 = vmatpush1.msra.mxu0 %v1379
  %1404 = vmatprep.subr.mxu0 0.0
  %1405 = vmatpush1.msra.mxu0 0.0
  %1406 = vmatprep.subr.mxu0 0.0
  %1407 = vmatpush1.msra.mxu0 0.0
  %1408 = vmatprep.subr.mxu0 0.0
  %1409 = vmatpush1.msra.mxu0 0.0
  %1410 = vmatprep.subr.mxu0 0.0
  %1411 = vmatpush1.msra.mxu0 0.0
  %1412 = vmatprep.subr.mxu0 0.0
  %1413 = vmatpush1.msra.mxu0 0.0
  %1414 = vmatprep.subr.mxu0 0.0
  %1415 = vmatpush1.msra.mxu0 0.0
  %1416 = vmatprep.subr.mxu0 0.0
  %1417 = vmatpush1.msra.mxu0 0.0
  %1418 = vmatprep.subr.mxu0 0.0
  %1419 = vmatpush1.msra.mxu0 0.0
  %1420 = vmatprep.subr.mxu0 0.0
  %1421 = vmatpush1.msra.mxu0 0.0
  %1422 = vmatprep.subr.mxu0 0.0
  %1423 = vmatpush1.msra.mxu0 0.0
  %1424 = vmatprep.subr.mxu0 0.0
  %1425 = vmatpush1.msra.mxu0 0.0
  %1426 = vmatprep.subr.mxu0 0.0
  %1427 = vmatpush1.msra.mxu0 0.0
  %1428 = vmatprep.subr.mxu0 0.0
  %1429 = vmatpush1.msra.mxu0 0.0
  %1430 = vmatprep.subr.mxu0 0.0
  %1431 = vmatpush1.msra.mxu0 0.0
  %1432 = vmatprep.subr.mxu0 0.0
  %1433 = vmatpush1.msra.mxu0 0.0
  %1434 = vmatprep.subr.mxu0 0.0
  %1435 = vmatpush1.msra.mxu0 0.0
  %1436 = vmatprep.subr.mxu0 0.0
  %1437 = vmatpush1.msra.mxu0 0.0
  %1438 = vmatprep.subr.mxu0 0.0
  %1439 = vmatpush1.msra.mxu0 0.0
  %1440 = vmatprep.subr.mxu0 0.0
  %1441 = vmatpush1.msra.mxu0 0.0
  %1442 = vmatprep.subr.mxu0 0.0
  %1443 = vmatpush1.msra.mxu0 0.0
  %1444 = vmatprep.subr.mxu0 0.0
  %1445 = vmatpush1.msra.mxu0 0.0
  %1446 = vmatprep.subr.mxu0 0.0
  %1447 = vmatpush1.msra.mxu0 0.0
  %1448 = vmatprep.subr.mxu0 0.0
  %1449 = vmatpush1.msra.mxu0 0.0
  %1450 = vmatprep.subr.mxu0 0.0
  %1451 = vmatpush1.msra.mxu0 0.0
  %1452 = vmatprep.subr.mxu0 0.0
  %1453 = vmatpush1.msra.mxu0 0.0
  %1454 = vmatprep.subr.mxu0 0.0
  %1455 = vmatpush1.msra.mxu0 0.0
  %1456 = vmatprep.subr.mxu0 0.0
  %1457 = vmatpush1.msra.mxu0 0.0
  %1458 = vmatprep.subr.mxu0 0.0
  %1459 = vmatpush1.msra.mxu0 0.0
  %1460 = vmatprep.subr.mxu0 0.0
  %1461 = vmatpush1.msra.mxu0 0.0
  %1462 = vmatprep.subr.mxu0 0.0
  %1463 = vmatpush1.msra.mxu0 0.0
  %1464 = vmatprep.subr.mxu0 0.0
  %1465 = vmatpush1.msra.mxu0 0.0
  %1466 = vmatprep.mubr.f32.mxu0 0.0
  %1467 = vmatmul.mubr.f32.gmra.mrb[0].mxu0 %v1397
  %v1468 = vpop.f32.mrb[0].mxu0
  %v1469 = vadd.f32 %v1389, %v1468
  %v1470 = vpop.f32.mrb[0].mxu0
  %1471 = vmatprep.mubr.f32.mxu0 0.0
  %1472 = vmatmul.mubr.f32.gmra.mrb[0].mxu0 %v1400
  %v1473 = vpop.f32.mrb[0].mxu0
  %v1474 = vadd.f32 %v1394, %v1473
  %v1475 = vpop.f32.mrb[0].mxu0
  %1476 = vdwg.mxu0
  %v1477 = vxor.u32 %v1469, 2147483648
  %v1478 = vxor.u32 %v1474, 2147483648
  %v1479 = vmul.f32 %v1477, 1.442695
  %v1480 = vpow.pop %v1479
  %v1481 = vmul.f32 %v1478, 1.442695
  %v1482 = vpow.pop %v1481
  %v1483 = vadd.f32 %v1480, 1.0
  %v1484 = vadd.f32 %v1482, 1.0
  %v1485 = vrcp.pop %v1483
  %v1486 = vmul.f32 1.0, %v1485
  %v1487 = vrcp.pop %v1484
  %v1488 = vmul.f32 1.0, %v1487
  %1489 = vxpose.xlu0.b32.start [1/16] %v1486, 128
  %1490 = vxpose.xlu0.b32.cont [2/16] %v1488, 128
  %1491 = vxpose.xlu0.b32.cont [3/16] 0.0, 128
  %1492 = vxpose.xlu0.b32.cont [4/16] 0.0, 128
  %1493 = vxpose.xlu0.b32.cont [5/16] 0.0, 128
  %1494 = vxpose.xlu0.b32.cont [6/16] 0.0, 128
  %1495 = vxpose.xlu0.b32.cont [7/16] 0.0, 128
  %1496 = vxpose.xlu0.b32.cont [8/16] 0.0, 128
  %1497 = vxpose.xlu0.b32.cont [9/16] 0.0, 128
  %1498 = vxpose.xlu0.b32.cont [10/16] 0.0, 128
  %1499 = vxpose.xlu0.b32.cont [11/16] 0.0, 128
  %1500 = vxpose.xlu0.b32.cont [12/16] 0.0, 128
  %1501 = vxpose.xlu0.b32.cont [13/16] 0.0, 128
  %1502 = vxpose.xlu0.b32.cont [14/16] 0.0, 128
  %1503 = vxpose.xlu0.b32.cont [15/16] 0.0, 128
  %1504 = vxpose.xlu0.b32.end [16/16] 0.0, 128
  %v1505 = vpop.trf.xlu0
  %v1506 = vpop.trf.xlu0
  %v1507 = vpop.trf.xlu0
  %v1508 = vpop.trf.xlu0
  %v1509 = vpop.trf.xlu0
  %v1510 = vpop.trf.xlu0
  %v1511 = vpop.trf.xlu0
  %v1512 = vpop.trf.xlu0
  %v1513 = vpop.trf.xlu0
  %v1514 = vpop.trf.xlu0
  %v1515 = vpop.trf.xlu0
  %v1516 = vpop.trf.xlu0
  %v1517 = vpop.trf.xlu0
  %v1518 = vpop.trf.xlu0
  %v1519 = vpop.trf.xlu0
  %v1520 = vpop.trf.xlu0
  %1521 = vst.msk [vmem:[%s3] sm:$0xff] %vm37, %v1505
  %1522 = vst.msk [vmem:[%s3 + $0x8] sm:$0xff] %vm37, %v1506
  %1523 = vst.msk [vmem:[%s3 + $0x10] sm:$0xff] %vm37, %v1507
  %1524 = vst.msk [vmem:[%s3 + $0x18] sm:$0xff] %vm37, %v1508
  %1525 = vst.msk [vmem:[%s3 + $0x20] sm:$0xff] %vm37, %v1509
  %1526 = vst.msk [vmem:[%s3 + $0x28] sm:$0xff] %vm37, %v1510
  %1527 = vst.msk [vmem:[%s3 + $0x30] sm:$0xff] %vm37, %v1511
  %1528 = vst.msk [vmem:[%s3 + $0x38] sm:$0xff] %vm37, %v1512
  %1529 = vst.msk [vmem:[%s3 + $0x40] sm:$0xff] %vm37, %v1513
  %1530 = vst.msk [vmem:[%s3 + $0x48] sm:$0xff] %vm37, %v1514
  %1531 = vst.msk [vmem:[%s3 + $0x50] sm:$0xff] %vm37, %v1515
  %1532 = vst.msk [vmem:[%s3 + $0x58] sm:$0xff] %vm37, %v1516
  %1533 = vst.msk [vmem:[%s3 + $0x60] sm:$0xff] %vm37, %v1517
  %1534 = vst.msk [vmem:[%s3 + $0x68] sm:$0xff] %vm37, %v1518
  %1535 = vst.msk [vmem:[%s3 + $0x70] sm:$0xff] %vm37, %v1519
  %1536 = vst.msk [vmem:[%s3 + $0x78] sm:$0xff] %vm37, %v1520
  // Predicated region
  $region14: #{autoencoder_forward.1} parent=0 // pred_check
    _
  $region15: #{autoencoder_forward.1} parent=0 // pred_check_branch
    %1538 = sbr.rel (0) target = $region17
  $region16: #{autoencoder_forward.1} parent=0 // pred_region
    _
  $region17: #{autoencoder_forward.1} parent=0 // pred_fallthru
    _
  // Predicated region
  $region18: #{autoencoder_forward.1} parent=0 // pred_check
    _
  $region19: #{autoencoder_forward.1} parent=0 // pred_check_branch
    %1540 = sbr.rel (0) target = $region21
  $region20: #{autoencoder_forward.1} parent=0 // pred_region
    _
  $region21: #{autoencoder_forward.1} parent=0 // pred_fallthru
    _

</llo_original>
